<compile_context>
chip_gen: v5e
topology: v5e:2x2
jax: 0.10.0
libtpu: 0.0.40
codegen_flags: <defaults>
</compile_context>

<pallas_src>
import jax
import jax.numpy as jnp
from jax import lax
from jax.experimental import pallas as pl
from jax.experimental.pallas import tpu as pltpu


def _make_kernel(T, B, H, V, F):
    """Build the kernel with all loop bounds baked in (static unrolling)."""
    FourH = 4 * H
    nbits = max(1, (V - 1).bit_length())      # bits needed for a column index
    low_mask = (1 << nbits) - 1

    def kernel(x_ref, we_ih_ref, we_hh_ref, be_ref,
               emb_proj_ref, wd_hh_ref, wfc_ref, bfc_ref, out_ref):
        # weights arrive pre-cast to bf16 (f32 accumulation everywhere)
        we_hh_bf = we_hh_ref[...]            # (H, 4H)  bf16
        emb_proj_bf = emb_proj_ref[...]      # (V, 4H)  bf16 (decoder bias folded in)
        wd_hh_bf = wd_hh_ref[...]            # (H, 4H)  bf16
        wfc_bf = wfc_ref[...]                # (H, V)   bf16
        bfc = bfc_ref[...]                   # (1, V)   f32

        def activate(gates):
            # ONE whole-vreg EUP push per step (4H == 128 lanes): the g-gate
            # pre-activations were pre-scaled by 2 in the weights, so
            # tanh(x) = 2*sigmoid(2x) - 1 costs only two VALU ops here.
            sig = jax.nn.sigmoid(gates)
            i = sig[:, 0 * H:1 * H]
            f = sig[:, 1 * H:2 * H]
            g = 2.0 * sig[:, 2 * H:3 * H] - 1.0
            o = sig[:, 3 * H:4 * H]
            return i, f, g, o

        # ---- encoder: all T input projections in ONE matmul (off-chain) ----
        xproj = jnp.dot(x_ref[...], we_ih_ref[...],
                        preferred_element_type=jnp.float32) + be_ref[...]   # (T*B, 4H)

        h = None
        c = None
        for t in range(T):                    # static unroll (T small & fixed)
            xg = xproj[t * B:(t + 1) * B, :]  # (B, 4H) static slice
            if t == 0:
                gates = xg                    # h == c == 0 at t == 0
            else:
                gates = xg + jnp.dot(h.astype(jnp.bfloat16), we_hh_bf,
                                     preferred_element_type=jnp.float32)
            i, f, g, o = activate(gates)
            c = i * g if t == 0 else f * c + i * g
            h = o * jnp.tanh(c)

        # ---- decoder: greedy autoregressive rollout ----
        col = lax.broadcasted_iota(jnp.int32, (B, V), 1)
        rev = (V - 1) - col                   # larger for smaller col -> first-occurrence tie-break

        # start-token input contribution: row 0 of the folded embedding.
        # bf16 row promoted to f32 -> bit-identical to later onehot @ emb_proj.
        ih = jnp.broadcast_to(emb_proj_bf[0:1, :].astype(jnp.float32),
                              (B, FourH))
        gh = jnp.dot(h.astype(jnp.bfloat16), wd_hh_bf,
                     preferred_element_type=jnp.float32)

        for s in range(F):                    # static unroll (F small & fixed)
            gates = ih + gh
            i, f, g, o = activate(gates)
            c = f * c + i * g
            h = o * jnp.tanh(c)
            h_bf = h.astype(jnp.bfloat16)     # cast once, shared by both dots

            # logits dot kept independent of the gates dot so its small
            # result is not stuck behind the 128-wide gate columns in the
            # MXU result FIFO (v5e/v6e); both share the same bf16 LHS.
            logits = jnp.dot(h_bf, wfc_bf,
                             preferred_element_type=jnp.float32) + bfc       # (B, V) f32
            out_ref[:, s, :] = logits         # static-index store, off the chain

            if s < F - 1:
                gh = jnp.dot(h_bf, wd_hh_bf,
                             preferred_element_type=jnp.float32)

                # single-reduce greedy argmax: order-preserving int32 key from
                # the f32 logits with (V-1-col) packed into the low bits, one
                # cross-lane max instead of max + where/min.
                bits = pltpu.bitcast(logits, jnp.int32)
                key = jnp.where(bits < 0, bits ^ jnp.int32(0x7FFFFFFF), bits)
                packed = (key & jnp.int32(~low_mask)) | rev
                best = jnp.max(packed, axis=1, keepdims=True)
                onehot = (packed == best).astype(jnp.bfloat16)   # exactly one lane per row
                ih = jnp.dot(onehot, emb_proj_bf,
                             preferred_element_type=jnp.float32)

    return kernel


def prepare_params(params):
    """One-time, weight-only preprocessing (kept off the per-call path)."""
    H = params["we_hh"].shape[0]

    def double_g(w):
        # pre-scale the g-gate (tanh) pre-activation columns by 2 so the
        # kernel recovers tanh from a single sigmoid: tanh(x) = 2*sig(2x) - 1
        return w.at[:, 2 * H:3 * H].multiply(2.0)

    # fold the embedding through the decoder input weights and fold the
    # decoder LSTM bias (b_ih + b_hh) into every embedding row:
    #   ih_row(v) = emb[v] @ wd_ih + bd
    emb_proj = jnp.dot(params["emb"], params["wd_ih"]) + params["bd"]      # (V, 4H)

    return {
        "we_ih": double_g(params["we_ih"]).astype(jnp.bfloat16),           # (D, 4H)
        "we_hh": double_g(params["we_hh"]).astype(jnp.bfloat16),           # (H, 4H)
        "be": double_g(params["be"]),                                      # (1, 4H) f32
        "emb_proj": double_g(emb_proj).astype(jnp.bfloat16),               # (V, 4H)
        "wd_hh": double_g(params["wd_hh"]).astype(jnp.bfloat16),           # (H, 4H)
        "wfc": params["wfc"].astype(jnp.bfloat16),                         # (H, V)
        "bfc": params["bfc"],                                              # (1, V) f32
    }


def autoregressive_lstm(x_hist, prep, future_len):
    """x_hist: (B, T, input_size) float32 (batch-first, like PyTorch)."""
    B, T, D = x_hist.shape
    H = prep["wd_hh"].shape[0]
    V = prep["wfc"].shape[1]

    # time-major + flatten to (T*B, D): layout plumbing for the single hoisted
    # encoder input-projection matmul (cast fuses with the transpose under jit)
    x2d = jnp.transpose(x_hist, (1, 0, 2)).reshape(T * B, D).astype(jnp.bfloat16)

    kernel = _make_kernel(T, B, H, V, future_len)
    vmem = pl.BlockSpec(memory_space=pltpu.MemorySpace.VMEM)
    out = pl.pallas_call(
        kernel,
        out_shape=jax.ShapeDtypeStruct((B, future_len, V), jnp.float32),
        in_specs=[vmem] * 8,
        out_specs=vmem,
    )(x2d, prep["we_ih"], prep["we_hh"], prep["be"],
      prep["emb_proj"], prep["wd_hh"], prep["wfc"], prep["bfc"])

    # torch.stack(preds, dim=1).squeeze(0): only squeezes when batch == 1
    if B == 1:
        out = out[0]
    return out


def init_params(key, input_size, hidden_size, output_size, embed_dim):
    H = hidden_size
    ks = jax.random.split(key, 12)
    bound_e = 1.0 / jnp.sqrt(H)
    bound_fc = 1.0 / jnp.sqrt(H)

    def u(k, shape, b):
        return jax.random.uniform(k, shape, jnp.float32, -b, b)

    params = {
        # encoder LSTM (weights stored transposed: (in, 4H) / (H, 4H))
        "we_ih": u(ks[0], (input_size, 4 * H), bound_e),
        "we_hh": u(ks[1], (H, 4 * H), bound_e),
        "be": u(ks[2], (1, 4 * H), bound_e) + u(ks[3], (1, 4 * H), bound_e),
        # embedding ~ N(0, 1) like nn.Embedding
        "emb": jax.random.normal(ks[4], (output_size, embed_dim), jnp.float32),
        # decoder LSTM
        "wd_ih": u(ks[5], (embed_dim, 4 * H), bound_e),
        "wd_hh": u(ks[6], (H, 4 * H), bound_e),
        "bd": u(ks[7], (1, 4 * H), bound_e) + u(ks[8], (1, 4 * H), bound_e),
        # fc: stored as (H, output_size) == W.T
        "wfc": u(ks[9], (H, output_size), bound_fc),
        "bfc": u(ks[10], (1, output_size), bound_fc),
    }
    return params


if __name__ == "__main__":
    input_size = 4
    hidden_size = 32
    output_size = 16
    embed_dim = 8
    batch = 2
    seq = 8
    future_len = 6

    key = jax.random.PRNGKey(0)
    k_param, k_x = jax.random.split(key)
    params = init_params(k_param, input_size, hidden_size, output_size, embed_dim)
    prep = prepare_params(params)           # one-time weight transform
    x_hist = jax.random.normal(k_x, (batch, seq, input_size), jnp.float32)

    fwd = jax.jit(autoregressive_lstm, static_argnums=2)
    out = jax.block_until_ready(fwd(x_hist, prep, future_len))
    assert out.shape == (batch, future_len, output_size), out.shape
    print("KERNEL_OK")
</pallas_src>

<mosaic_0001>
module attributes {stable_mosaic.version = 11 : i64} {
  func.func @kernel(%arg0: memref<16x4xbf16, #tpu.memory_space<vmem>>, %arg1: memref<4x128xbf16, #tpu.memory_space<vmem>>, %arg2: memref<32x128xbf16, #tpu.memory_space<vmem>>, %arg3: memref<1x128xf32, #tpu.memory_space<vmem>>, %arg4: memref<16x128xbf16, #tpu.memory_space<vmem>>, %arg5: memref<32x128xbf16, #tpu.memory_space<vmem>>, %arg6: memref<32x16xbf16, #tpu.memory_space<vmem>>, %arg7: memref<1x16xf32, #tpu.memory_space<vmem>>, %arg8: memref<2x6x16xf32, #tpu.memory_space<vmem>>) attributes {dimension_semantics = [], scalar_prefetch = 0 : i64, scratch_operands = 0 : i64, tpu.core_type = #tpu.core_type<tc>} {
    %c0 = arith.constant 0 : index
    %c0_0 = arith.constant 0 : index
    %0 = vector.load %arg2[%c0, %c0_0] : memref<32x128xbf16, #tpu.memory_space<vmem>>, vector<32x128xbf16>
    %c0_1 = arith.constant 0 : index
    %c0_2 = arith.constant 0 : index
    %1 = vector.load %arg4[%c0_1, %c0_2] : memref<16x128xbf16, #tpu.memory_space<vmem>>, vector<16x128xbf16>
    %c0_3 = arith.constant 0 : index
    %c0_4 = arith.constant 0 : index
    %2 = vector.load %arg5[%c0_3, %c0_4] : memref<32x128xbf16, #tpu.memory_space<vmem>>, vector<32x128xbf16>
    %c0_5 = arith.constant 0 : index
    %c0_6 = arith.constant 0 : index
    %3 = vector.load %arg6[%c0_5, %c0_6] : memref<32x16xbf16, #tpu.memory_space<vmem>>, vector<32x16xbf16>
    %c0_7 = arith.constant 0 : index
    %c0_8 = arith.constant 0 : index
    %4 = vector.load %arg7[%c0_7, %c0_8] : memref<1x16xf32, #tpu.memory_space<vmem>>, vector<1x16xf32>
    %c0_9 = arith.constant 0 : index
    %c0_10 = arith.constant 0 : index
    %5 = vector.load %arg0[%c0_9, %c0_10] : memref<16x4xbf16, #tpu.memory_space<vmem>>, vector<16x4xbf16>
    %c0_11 = arith.constant 0 : index
    %c0_12 = arith.constant 0 : index
    %6 = vector.load %arg1[%c0_11, %c0_12] : memref<4x128xbf16, #tpu.memory_space<vmem>>, vector<4x128xbf16>
    %cst = arith.constant dense<0.000000e+00> : vector<16x128xf32>
    %7 = tpu.matmul %5, %6, %cst {dimension_numbers = #tpu.dot_dimension_numbers<[1], [0], [0], [1], [0, 0, 1, 1], [], []>} : vector<16x4xbf16>, vector<4x128xbf16>, vector<16x128xf32> -> vector<16x128xf32>
    %c0_13 = arith.constant 0 : index
    %c0_14 = arith.constant 0 : index
    %8 = vector.load %arg3[%c0_13, %c0_14] : memref<1x128xf32, #tpu.memory_space<vmem>>, vector<1x128xf32>
    %9 = vector.broadcast %8 : vector<1x128xf32> to vector<16x128xf32>
    %10 = arith.addf %7, %9 : vector<16x128xf32>
    %11 = vector.extract_strided_slice %10 {offsets = [0, 0], sizes = [2, 128], strides = [1, 1]} : vector<16x128xf32> to vector<2x128xf32>
    %12 = arith.negf %11 : vector<2x128xf32>
    %13 = math.exp %12 : vector<2x128xf32>
    %cst_15 = arith.constant 1.000000e+00 : f32
    %14 = vector.broadcast %cst_15 : f32 to vector<2x128xf32>
    %15 = arith.addf %14, %13 : vector<2x128xf32>
    %16 = arith.divf %14, %15 : vector<2x128xf32>
    %17 = vector.extract_strided_slice %16 {offsets = [0, 0], sizes = [2, 32], strides = [1, 1]} : vector<2x128xf32> to vector<2x32xf32>
    %18 = vector.extract_strided_slice %16 {offsets = [0, 64], sizes = [2, 32], strides = [1, 1]} : vector<2x128xf32> to vector<2x32xf32>
    %cst_16 = arith.constant 2.000000e+00 : f32
    %19 = vector.broadcast %cst_16 : f32 to vector<2x32xf32>
    %20 = arith.mulf %19, %18 : vector<2x32xf32>
    %cst_17 = arith.constant 1.000000e+00 : f32
    %21 = vector.broadcast %cst_17 : f32 to vector<2x32xf32>
    %22 = arith.subf %20, %21 : vector<2x32xf32>
    %23 = vector.extract_strided_slice %16 {offsets = [0, 96], sizes = [2, 32], strides = [1, 1]} : vector<2x128xf32> to vector<2x32xf32>
    %24 = arith.mulf %17, %22 : vector<2x32xf32>
    %25 = math.tanh %24 : vector<2x32xf32>
    %26 = arith.mulf %23, %25 : vector<2x32xf32>
    %27 = vector.extract_strided_slice %10 {offsets = [2, 0], sizes = [2, 128], strides = [1, 1]} : vector<16x128xf32> to vector<2x128xf32>
    %28 = arith.truncf %26 : vector<2x32xf32> to vector<2x32xbf16>
    %cst_18 = arith.constant dense<0.000000e+00> : vector<2x128xf32>
    %29 = tpu.matmul %28, %0, %cst_18 {dimension_numbers = #tpu.dot_dimension_numbers<[1], [0], [0], [1], [0, 0, 1, 1], [], []>} : vector<2x32xbf16>, vector<32x128xbf16>, vector<2x128xf32> -> vector<2x128xf32>
    %30 = arith.addf %27, %29 : vector<2x128xf32>
    %31 = arith.negf %30 : vector<2x128xf32>
    %32 = math.exp %31 : vector<2x128xf32>
    %cst_19 = arith.constant 1.000000e+00 : f32
    %33 = vector.broadcast %cst_19 : f32 to vector<2x128xf32>
    %34 = arith.addf %33, %32 : vector<2x128xf32>
    %35 = arith.divf %33, %34 : vector<2x128xf32>
    %36 = vector.extract_strided_slice %35 {offsets = [0, 0], sizes = [2, 32], strides = [1, 1]} : vector<2x128xf32> to vector<2x32xf32>
    %37 = vector.extract_strided_slice %35 {offsets = [0, 32], sizes = [2, 32], strides = [1, 1]} : vector<2x128xf32> to vector<2x32xf32>
    %38 = vector.extract_strided_slice %35 {offsets = [0, 64], sizes = [2, 32], strides = [1, 1]} : vector<2x128xf32> to vector<2x32xf32>
    %cst_20 = arith.constant 2.000000e+00 : f32
    %39 = vector.broadcast %cst_20 : f32 to vector<2x32xf32>
    %40 = arith.mulf %39, %38 : vector<2x32xf32>
    %cst_21 = arith.constant 1.000000e+00 : f32
    %41 = vector.broadcast %cst_21 : f32 to vector<2x32xf32>
    %42 = arith.subf %40, %41 : vector<2x32xf32>
    %43 = vector.extract_strided_slice %35 {offsets = [0, 96], sizes = [2, 32], strides = [1, 1]} : vector<2x128xf32> to vector<2x32xf32>
    %44 = arith.mulf %37, %24 : vector<2x32xf32>
    %45 = arith.mulf %36, %42 : vector<2x32xf32>
    %46 = arith.addf %44, %45 : vector<2x32xf32>
    %47 = math.tanh %46 : vector<2x32xf32>
    %48 = arith.mulf %43, %47 : vector<2x32xf32>
    %49 = vector.extract_strided_slice %10 {offsets = [4, 0], sizes = [2, 128], strides = [1, 1]} : vector<16x128xf32> to vector<2x128xf32>
    %50 = arith.truncf %48 : vector<2x32xf32> to vector<2x32xbf16>
    %cst_22 = arith.constant dense<0.000000e+00> : vector<2x128xf32>
    %51 = tpu.matmul %50, %0, %cst_22 {dimension_numbers = #tpu.dot_dimension_numbers<[1], [0], [0], [1], [0, 0, 1, 1], [], []>} : vector<2x32xbf16>, vector<32x128xbf16>, vector<2x128xf32> -> vector<2x128xf32>
    %52 = arith.addf %49, %51 : vector<2x128xf32>
    %53 = arith.negf %52 : vector<2x128xf32>
    %54 = math.exp %53 : vector<2x128xf32>
    %cst_23 = arith.constant 1.000000e+00 : f32
    %55 = vector.broadcast %cst_23 : f32 to vector<2x128xf32>
    %56 = arith.addf %55, %54 : vector<2x128xf32>
    %57 = arith.divf %55, %56 : vector<2x128xf32>
    %58 = vector.extract_strided_slice %57 {offsets = [0, 0], sizes = [2, 32], strides = [1, 1]} : vector<2x128xf32> to vector<2x32xf32>
    %59 = vector.extract_strided_slice %57 {offsets = [0, 32], sizes = [2, 32], strides = [1, 1]} : vector<2x128xf32> to vector<2x32xf32>
    %60 = vector.extract_strided_slice %57 {offsets = [0, 64], sizes = [2, 32], strides = [1, 1]} : vector<2x128xf32> to vector<2x32xf32>
    %cst_24 = arith.constant 2.000000e+00 : f32
    %61 = vector.broadcast %cst_24 : f32 to vector<2x32xf32>
    %62 = arith.mulf %61, %60 : vector<2x32xf32>
    %cst_25 = arith.constant 1.000000e+00 : f32
    %63 = vector.broadcast %cst_25 : f32 to vector<2x32xf32>
    %64 = arith.subf %62, %63 : vector<2x32xf32>
    %65 = vector.extract_strided_slice %57 {offsets = [0, 96], sizes = [2, 32], strides = [1, 1]} : vector<2x128xf32> to vector<2x32xf32>
    %66 = arith.mulf %59, %46 : vector<2x32xf32>
    %67 = arith.mulf %58, %64 : vector<2x32xf32>
    %68 = arith.addf %66, %67 : vector<2x32xf32>
    %69 = math.tanh %68 : vector<2x32xf32>
    %70 = arith.mulf %65, %69 : vector<2x32xf32>
    %71 = vector.extract_strided_slice %10 {offsets = [6, 0], sizes = [2, 128], strides = [1, 1]} : vector<16x128xf32> to vector<2x128xf32>
    %72 = arith.truncf %70 : vector<2x32xf32> to vector<2x32xbf16>
    %cst_26 = arith.constant dense<0.000000e+00> : vector<2x128xf32>
    %73 = tpu.matmul %72, %0, %cst_26 {dimension_numbers = #tpu.dot_dimension_numbers<[1], [0], [0], [1], [0, 0, 1, 1], [], []>} : vector<2x32xbf16>, vector<32x128xbf16>, vector<2x128xf32> -> vector<2x128xf32>
    %74 = arith.addf %71, %73 : vector<2x128xf32>
    %75 = arith.negf %74 : vector<2x128xf32>
    %76 = math.exp %75 : vector<2x128xf32>
    %cst_27 = arith.constant 1.000000e+00 : f32
    %77 = vector.broadcast %cst_27 : f32 to vector<2x128xf32>
    %78 = arith.addf %77, %76 : vector<2x128xf32>
    %79 = arith.divf %77, %78 : vector<2x128xf32>
    %80 = vector.extract_strided_slice %79 {offsets = [0, 0], sizes = [2, 32], strides = [1, 1]} : vector<2x128xf32> to vector<2x32xf32>
    %81 = vector.extract_strided_slice %79 {offsets = [0, 32], sizes = [2, 32], strides = [1, 1]} : vector<2x128xf32> to vector<2x32xf32>
    %82 = vector.extract_strided_slice %79 {offsets = [0, 64], sizes = [2, 32], strides = [1, 1]} : vector<2x128xf32> to vector<2x32xf32>
    %cst_28 = arith.constant 2.000000e+00 : f32
    %83 = vector.broadcast %cst_28 : f32 to vector<2x32xf32>
    %84 = arith.mulf %83, %82 : vector<2x32xf32>
    %cst_29 = arith.constant 1.000000e+00 : f32
    %85 = vector.broadcast %cst_29 : f32 to vector<2x32xf32>
    %86 = arith.subf %84, %85 : vector<2x32xf32>
    %87 = vector.extract_strided_slice %79 {offsets = [0, 96], sizes = [2, 32], strides = [1, 1]} : vector<2x128xf32> to vector<2x32xf32>
    %88 = arith.mulf %81, %68 : vector<2x32xf32>
    %89 = arith.mulf %80, %86 : vector<2x32xf32>
    %90 = arith.addf %88, %89 : vector<2x32xf32>
    %91 = math.tanh %90 : vector<2x32xf32>
    %92 = arith.mulf %87, %91 : vector<2x32xf32>
    %93 = vector.extract_strided_slice %10 {offsets = [8, 0], sizes = [2, 128], strides = [1, 1]} : vector<16x128xf32> to vector<2x128xf32>
    %94 = arith.truncf %92 : vector<2x32xf32> to vector<2x32xbf16>
    %cst_30 = arith.constant dense<0.000000e+00> : vector<2x128xf32>
    %95 = tpu.matmul %94, %0, %cst_30 {dimension_numbers = #tpu.dot_dimension_numbers<[1], [0], [0], [1], [0, 0, 1, 1], [], []>} : vector<2x32xbf16>, vector<32x128xbf16>, vector<2x128xf32> -> vector<2x128xf32>
    %96 = arith.addf %93, %95 : vector<2x128xf32>
    %97 = arith.negf %96 : vector<2x128xf32>
    %98 = math.exp %97 : vector<2x128xf32>
    %cst_31 = arith.constant 1.000000e+00 : f32
    %99 = vector.broadcast %cst_31 : f32 to vector<2x128xf32>
    %100 = arith.addf %99, %98 : vector<2x128xf32>
    %101 = arith.divf %99, %100 : vector<2x128xf32>
    %102 = vector.extract_strided_slice %101 {offsets = [0, 0], sizes = [2, 32], strides = [1, 1]} : vector<2x128xf32> to vector<2x32xf32>
    %103 = vector.extract_strided_slice %101 {offsets = [0, 32], sizes = [2, 32], strides = [1, 1]} : vector<2x128xf32> to vector<2x32xf32>
    %104 = vector.extract_strided_slice %101 {offsets = [0, 64], sizes = [2, 32], strides = [1, 1]} : vector<2x128xf32> to vector<2x32xf32>
    %cst_32 = arith.constant 2.000000e+00 : f32
    %105 = vector.broadcast %cst_32 : f32 to vector<2x32xf32>
    %106 = arith.mulf %105, %104 : vector<2x32xf32>
    %cst_33 = arith.constant 1.000000e+00 : f32
    %107 = vector.broadcast %cst_33 : f32 to vector<2x32xf32>
    %108 = arith.subf %106, %107 : vector<2x32xf32>
    %109 = vector.extract_strided_slice %101 {offsets = [0, 96], sizes = [2, 32], strides = [1, 1]} : vector<2x128xf32> to vector<2x32xf32>
    %110 = arith.mulf %103, %90 : vector<2x32xf32>
    %111 = arith.mulf %102, %108 : vector<2x32xf32>
    %112 = arith.addf %110, %111 : vector<2x32xf32>
    %113 = math.tanh %112 : vector<2x32xf32>
    %114 = arith.mulf %109, %113 : vector<2x32xf32>
    %115 = vector.extract_strided_slice %10 {offsets = [10, 0], sizes = [2, 128], strides = [1, 1]} : vector<16x128xf32> to vector<2x128xf32>
    %116 = arith.truncf %114 : vector<2x32xf32> to vector<2x32xbf16>
    %cst_34 = arith.constant dense<0.000000e+00> : vector<2x128xf32>
    %117 = tpu.matmul %116, %0, %cst_34 {dimension_numbers = #tpu.dot_dimension_numbers<[1], [0], [0], [1], [0, 0, 1, 1], [], []>} : vector<2x32xbf16>, vector<32x128xbf16>, vector<2x128xf32> -> vector<2x128xf32>
    %118 = arith.addf %115, %117 : vector<2x128xf32>
    %119 = arith.negf %118 : vector<2x128xf32>
    %120 = math.exp %119 : vector<2x128xf32>
    %cst_35 = arith.constant 1.000000e+00 : f32
    %121 = vector.broadcast %cst_35 : f32 to vector<2x128xf32>
    %122 = arith.addf %121, %120 : vector<2x128xf32>
    %123 = arith.divf %121, %122 : vector<2x128xf32>
    %124 = vector.extract_strided_slice %123 {offsets = [0, 0], sizes = [2, 32], strides = [1, 1]} : vector<2x128xf32> to vector<2x32xf32>
    %125 = vector.extract_strided_slice %123 {offsets = [0, 32], sizes = [2, 32], strides = [1, 1]} : vector<2x128xf32> to vector<2x32xf32>
    %126 = vector.extract_strided_slice %123 {offsets = [0, 64], sizes = [2, 32], strides = [1, 1]} : vector<2x128xf32> to vector<2x32xf32>
    %cst_36 = arith.constant 2.000000e+00 : f32
    %127 = vector.broadcast %cst_36 : f32 to vector<2x32xf32>
    %128 = arith.mulf %127, %126 : vector<2x32xf32>
    %cst_37 = arith.constant 1.000000e+00 : f32
    %129 = vector.broadcast %cst_37 : f32 to vector<2x32xf32>
    %130 = arith.subf %128, %129 : vector<2x32xf32>
    %131 = vector.extract_strided_slice %123 {offsets = [0, 96], sizes = [2, 32], strides = [1, 1]} : vector<2x128xf32> to vector<2x32xf32>
    %132 = arith.mulf %125, %112 : vector<2x32xf32>
    %133 = arith.mulf %124, %130 : vector<2x32xf32>
    %134 = arith.addf %132, %133 : vector<2x32xf32>
    %135 = math.tanh %134 : vector<2x32xf32>
    %136 = arith.mulf %131, %135 : vector<2x32xf32>
    %137 = vector.extract_strided_slice %10 {offsets = [12, 0], sizes = [2, 128], strides = [1, 1]} : vector<16x128xf32> to vector<2x128xf32>
    %138 = arith.truncf %136 : vector<2x32xf32> to vector<2x32xbf16>
    %cst_38 = arith.constant dense<0.000000e+00> : vector<2x128xf32>
    %139 = tpu.matmul %138, %0, %cst_38 {dimension_numbers = #tpu.dot_dimension_numbers<[1], [0], [0], [1], [0, 0, 1, 1], [], []>} : vector<2x32xbf16>, vector<32x128xbf16>, vector<2x128xf32> -> vector<2x128xf32>
    %140 = arith.addf %137, %139 : vector<2x128xf32>
    %141 = arith.negf %140 : vector<2x128xf32>
    %142 = math.exp %141 : vector<2x128xf32>
    %cst_39 = arith.constant 1.000000e+00 : f32
    %143 = vector.broadcast %cst_39 : f32 to vector<2x128xf32>
    %144 = arith.addf %143, %142 : vector<2x128xf32>
    %145 = arith.divf %143, %144 : vector<2x128xf32>
    %146 = vector.extract_strided_slice %145 {offsets = [0, 0], sizes = [2, 32], strides = [1, 1]} : vector<2x128xf32> to vector<2x32xf32>
    %147 = vector.extract_strided_slice %145 {offsets = [0, 32], sizes = [2, 32], strides = [1, 1]} : vector<2x128xf32> to vector<2x32xf32>
    %148 = vector.extract_strided_slice %145 {offsets = [0, 64], sizes = [2, 32], strides = [1, 1]} : vector<2x128xf32> to vector<2x32xf32>
    %cst_40 = arith.constant 2.000000e+00 : f32
    %149 = vector.broadcast %cst_40 : f32 to vector<2x32xf32>
    %150 = arith.mulf %149, %148 : vector<2x32xf32>
    %cst_41 = arith.constant 1.000000e+00 : f32
    %151 = vector.broadcast %cst_41 : f32 to vector<2x32xf32>
    %152 = arith.subf %150, %151 : vector<2x32xf32>
    %153 = vector.extract_strided_slice %145 {offsets = [0, 96], sizes = [2, 32], strides = [1, 1]} : vector<2x128xf32> to vector<2x32xf32>
    %154 = arith.mulf %147, %134 : vector<2x32xf32>
    %155 = arith.mulf %146, %152 : vector<2x32xf32>
    %156 = arith.addf %154, %155 : vector<2x32xf32>
    %157 = math.tanh %156 : vector<2x32xf32>
    %158 = arith.mulf %153, %157 : vector<2x32xf32>
    %159 = vector.extract_strided_slice %10 {offsets = [14, 0], sizes = [2, 128], strides = [1, 1]} : vector<16x128xf32> to vector<2x128xf32>
    %160 = arith.truncf %158 : vector<2x32xf32> to vector<2x32xbf16>
    %cst_42 = arith.constant dense<0.000000e+00> : vector<2x128xf32>
    %161 = tpu.matmul %160, %0, %cst_42 {dimension_numbers = #tpu.dot_dimension_numbers<[1], [0], [0], [1], [0, 0, 1, 1], [], []>} : vector<2x32xbf16>, vector<32x128xbf16>, vector<2x128xf32> -> vector<2x128xf32>
    %162 = arith.addf %159, %161 : vector<2x128xf32>
    %163 = arith.negf %162 : vector<2x128xf32>
    %164 = math.exp %163 : vector<2x128xf32>
    %cst_43 = arith.constant 1.000000e+00 : f32
    %165 = vector.broadcast %cst_43 : f32 to vector<2x128xf32>
    %166 = arith.addf %165, %164 : vector<2x128xf32>
    %167 = arith.divf %165, %166 : vector<2x128xf32>
    %168 = vector.extract_strided_slice %167 {offsets = [0, 0], sizes = [2, 32], strides = [1, 1]} : vector<2x128xf32> to vector<2x32xf32>
    %169 = vector.extract_strided_slice %167 {offsets = [0, 32], sizes = [2, 32], strides = [1, 1]} : vector<2x128xf32> to vector<2x32xf32>
    %170 = vector.extract_strided_slice %167 {offsets = [0, 64], sizes = [2, 32], strides = [1, 1]} : vector<2x128xf32> to vector<2x32xf32>
    %cst_44 = arith.constant 2.000000e+00 : f32
    %171 = vector.broadcast %cst_44 : f32 to vector<2x32xf32>
    %172 = arith.mulf %171, %170 : vector<2x32xf32>
    %cst_45 = arith.constant 1.000000e+00 : f32
    %173 = vector.broadcast %cst_45 : f32 to vector<2x32xf32>
    %174 = arith.subf %172, %173 : vector<2x32xf32>
    %175 = vector.extract_strided_slice %167 {offsets = [0, 96], sizes = [2, 32], strides = [1, 1]} : vector<2x128xf32> to vector<2x32xf32>
    %176 = arith.mulf %169, %156 : vector<2x32xf32>
    %177 = arith.mulf %168, %174 : vector<2x32xf32>
    %178 = arith.addf %176, %177 : vector<2x32xf32>
    %179 = math.tanh %178 : vector<2x32xf32>
    %180 = arith.mulf %175, %179 : vector<2x32xf32>
    %181 = tpu.iota {dimensions = array<i32: 1>} : vector<2x16xi32>
    %c15_i32 = arith.constant 15 : i32
    %182 = vector.broadcast %c15_i32 : i32 to vector<2x16xi32>
    %183 = arith.subi %182, %181 : vector<2x16xi32>
    %184 = vector.extract_strided_slice %1 {offsets = [0, 0], sizes = [1, 128], strides = [1, 1]} : vector<16x128xbf16> to vector<1x128xbf16>
    %185 = arith.extf %184 : vector<1x128xbf16> to vector<1x128xf32>
    %186 = vector.shape_cast %185 : vector<1x128xf32> to vector<1x128xf32>
    %187 = vector.broadcast %186 : vector<1x128xf32> to vector<2x128xf32>
    %188 = arith.truncf %180 : vector<2x32xf32> to vector<2x32xbf16>
    %cst_46 = arith.constant dense<0.000000e+00> : vector<2x128xf32>
    %189 = tpu.matmul %188, %2, %cst_46 {dimension_numbers = #tpu.dot_dimension_numbers<[1], [0], [0], [1], [0, 0, 1, 1], [], []>} : vector<2x32xbf16>, vector<32x128xbf16>, vector<2x128xf32> -> vector<2x128xf32>
    %190 = arith.addf %187, %189 : vector<2x128xf32>
    %191 = arith.negf %190 : vector<2x128xf32>
    %192 = math.exp %191 : vector<2x128xf32>
    %cst_47 = arith.constant 1.000000e+00 : f32
    %193 = vector.broadcast %cst_47 : f32 to vector<2x128xf32>
    %194 = arith.addf %193, %192 : vector<2x128xf32>
    %195 = arith.divf %193, %194 : vector<2x128xf32>
    %196 = vector.extract_strided_slice %195 {offsets = [0, 0], sizes = [2, 32], strides = [1, 1]} : vector<2x128xf32> to vector<2x32xf32>
    %197 = vector.extract_strided_slice %195 {offsets = [0, 32], sizes = [2, 32], strides = [1, 1]} : vector<2x128xf32> to vector<2x32xf32>
    %198 = vector.extract_strided_slice %195 {offsets = [0, 64], sizes = [2, 32], strides = [1, 1]} : vector<2x128xf32> to vector<2x32xf32>
    %cst_48 = arith.constant 2.000000e+00 : f32
    %199 = vector.broadcast %cst_48 : f32 to vector<2x32xf32>
    %200 = arith.mulf %199, %198 : vector<2x32xf32>
    %cst_49 = arith.constant 1.000000e+00 : f32
    %201 = vector.broadcast %cst_49 : f32 to vector<2x32xf32>
    %202 = arith.subf %200, %201 : vector<2x32xf32>
    %203 = vector.extract_strided_slice %195 {offsets = [0, 96], sizes = [2, 32], strides = [1, 1]} : vector<2x128xf32> to vector<2x32xf32>
    %204 = arith.mulf %197, %178 : vector<2x32xf32>
    %205 = arith.mulf %196, %202 : vector<2x32xf32>
    %206 = arith.addf %204, %205 : vector<2x32xf32>
    %207 = math.tanh %206 : vector<2x32xf32>
    %208 = arith.mulf %203, %207 : vector<2x32xf32>
    %209 = arith.truncf %208 : vector<2x32xf32> to vector<2x32xbf16>
    %cst_50 = arith.constant dense<0.000000e+00> : vector<2x16xf32>
    %210 = tpu.matmul %209, %3, %cst_50 {dimension_numbers = #tpu.dot_dimension_numbers<[1], [0], [0], [1], [0, 0, 1, 1], [], []>} : vector<2x32xbf16>, vector<32x16xbf16>, vector<2x16xf32> -> vector<2x16xf32>
    %211 = vector.broadcast %4 : vector<1x16xf32> to vector<2x16xf32>
    %212 = arith.addf %210, %211 : vector<2x16xf32>
    %c0_51 = arith.constant 0 : index
    %c0_52 = arith.constant 0 : index
    %c0_53 = arith.constant 0 : index
    %213 = vector.load %arg8[%c0_51, %c0_52, %c0_53] : memref<2x6x16xf32, #tpu.memory_space<vmem>>, vector<2x1x16xf32>
    %214 = vector.shape_cast %213 : vector<2x1x16xf32> to vector<2x16xf32>
    %215 = vector.shape_cast %212 : vector<2x16xf32> to vector<2x1x16xf32>
    tpu.vector_store %arg8[%c0_51, %c0_52, %c0_53], %215 {strides = array<i32>} : memref<2x6x16xf32, #tpu.memory_space<vmem>>, vector<2x1x16xf32>,
    %cst_54 = arith.constant dense<0.000000e+00> : vector<2x128xf32>
    %216 = tpu.matmul %209, %2, %cst_54 {dimension_numbers = #tpu.dot_dimension_numbers<[1], [0], [0], [1], [0, 0, 1, 1], [], []>} : vector<2x32xbf16>, vector<32x128xbf16>, vector<2x128xf32> -> vector<2x128xf32>
    %217 = tpu.bitcast %212 : vector<2x16xf32> -> vector<2x16xi32>
    %c0_i32 = arith.constant 0 : i32
    %218 = vector.broadcast %c0_i32 : i32 to vector<2x16xi32>
    %219 = arith.cmpi slt, %217, %218 : vector<2x16xi32>
    %c2147483647_i32 = arith.constant 2147483647 : i32
    %220 = vector.broadcast %c2147483647_i32 : i32 to vector<2x16xi32>
    %221 = arith.xori %217, %220 : vector<2x16xi32>
    %222 = arith.select %219, %221, %217 : vector<2x16xi1>, vector<2x16xi32>
    %c-16_i32 = arith.constant -16 : i32
    %223 = vector.broadcast %c-16_i32 : i32 to vector<2x16xi32>
    %224 = arith.andi %222, %223 : vector<2x16xi32>
    %225 = arith.ori %224, %183 : vector<2x16xi32>
    %cst_55 = arith.constant dense<-2147483648> : vector<2xi32>
    %226 = vector.multi_reduction <maxsi>, %225, %cst_55 [1] : vector<2x16xi32> to vector<2xi32>
    %227 = vector.shape_cast %226 : vector<2xi32> to vector<2x1xi32>
    %228 = vector.broadcast %227 : vector<2x1xi32> to vector<2x16xi32>
    %229 = arith.cmpi eq, %225, %228 : vector<2x16xi32>
    %230 = arith.extui %229 : vector<2x16xi1> to vector<2x16xi32>
    %231 = arith.sitofp %230 : vector<2x16xi32> to vector<2x16xf32>
    %232 = arith.truncf %231 : vector<2x16xf32> to vector<2x16xbf16>
    %cst_56 = arith.constant dense<0.000000e+00> : vector<2x128xf32>
    %233 = tpu.matmul %232, %1, %cst_56 {dimension_numbers = #tpu.dot_dimension_numbers<[1], [0], [0], [1], [0, 0, 1, 1], [], []>} : vector<2x16xbf16>, vector<16x128xbf16>, vector<2x128xf32> -> vector<2x128xf32>
    %234 = arith.addf %233, %216 : vector<2x128xf32>
    %235 = arith.negf %234 : vector<2x128xf32>
    %236 = math.exp %235 : vector<2x128xf32>
    %cst_57 = arith.constant 1.000000e+00 : f32
    %237 = vector.broadcast %cst_57 : f32 to vector<2x128xf32>
    %238 = arith.addf %237, %236 : vector<2x128xf32>
    %239 = arith.divf %237, %238 : vector<2x128xf32>
    %240 = vector.extract_strided_slice %239 {offsets = [0, 0], sizes = [2, 32], strides = [1, 1]} : vector<2x128xf32> to vector<2x32xf32>
    %241 = vector.extract_strided_slice %239 {offsets = [0, 32], sizes = [2, 32], strides = [1, 1]} : vector<2x128xf32> to vector<2x32xf32>
    %242 = vector.extract_strided_slice %239 {offsets = [0, 64], sizes = [2, 32], strides = [1, 1]} : vector<2x128xf32> to vector<2x32xf32>
    %cst_58 = arith.constant 2.000000e+00 : f32
    %243 = vector.broadcast %cst_58 : f32 to vector<2x32xf32>
    %244 = arith.mulf %243, %242 : vector<2x32xf32>
    %cst_59 = arith.constant 1.000000e+00 : f32
    %245 = vector.broadcast %cst_59 : f32 to vector<2x32xf32>
    %246 = arith.subf %244, %245 : vector<2x32xf32>
    %247 = vector.extract_strided_slice %239 {offsets = [0, 96], sizes = [2, 32], strides = [1, 1]} : vector<2x128xf32> to vector<2x32xf32>
    %248 = arith.mulf %241, %206 : vector<2x32xf32>
    %249 = arith.mulf %240, %246 : vector<2x32xf32>
    %250 = arith.addf %248, %249 : vector<2x32xf32>
    %251 = math.tanh %250 : vector<2x32xf32>
    %252 = arith.mulf %247, %251 : vector<2x32xf32>
    %253 = arith.truncf %252 : vector<2x32xf32> to vector<2x32xbf16>
    %cst_60 = arith.constant dense<0.000000e+00> : vector<2x16xf32>
    %254 = tpu.matmul %253, %3, %cst_60 {dimension_numbers = #tpu.dot_dimension_numbers<[1], [0], [0], [1], [0, 0, 1, 1], [], []>} : vector<2x32xbf16>, vector<32x16xbf16>, vector<2x16xf32> -> vector<2x16xf32>
    %255 = vector.broadcast %4 : vector<1x16xf32> to vector<2x16xf32>
    %256 = arith.addf %254, %255 : vector<2x16xf32>
    %c0_61 = arith.constant 0 : index
    %c1 = arith.constant 1 : index
    %c0_62 = arith.constant 0 : index
    %257 = vector.load %arg8[%c0_61, %c1, %c0_62] : memref<2x6x16xf32, #tpu.memory_space<vmem>>, vector<2x1x16xf32>
    %258 = vector.shape_cast %257 : vector<2x1x16xf32> to vector<2x16xf32>
    %259 = vector.shape_cast %256 : vector<2x16xf32> to vector<2x1x16xf32>
    tpu.vector_store %arg8[%c0_61, %c1, %c0_62], %259 {strides = array<i32>} : memref<2x6x16xf32, #tpu.memory_space<vmem>>, vector<2x1x16xf32>,
    %cst_63 = arith.constant dense<0.000000e+00> : vector<2x128xf32>
    %260 = tpu.matmul %253, %2, %cst_63 {dimension_numbers = #tpu.dot_dimension_numbers<[1], [0], [0], [1], [0, 0, 1, 1], [], []>} : vector<2x32xbf16>, vector<32x128xbf16>, vector<2x128xf32> -> vector<2x128xf32>
    %261 = tpu.bitcast %256 : vector<2x16xf32> -> vector<2x16xi32>
    %c0_i32_64 = arith.constant 0 : i32
    %262 = vector.broadcast %c0_i32_64 : i32 to vector<2x16xi32>
    %263 = arith.cmpi slt, %261, %262 : vector<2x16xi32>
    %c2147483647_i32_65 = arith.constant 2147483647 : i32
    %264 = vector.broadcast %c2147483647_i32_65 : i32 to vector<2x16xi32>
    %265 = arith.xori %261, %264 : vector<2x16xi32>
    %266 = arith.select %263, %265, %261 : vector<2x16xi1>, vector<2x16xi32>
    %c-16_i32_66 = arith.constant -16 : i32
    %267 = vector.broadcast %c-16_i32_66 : i32 to vector<2x16xi32>
    %268 = arith.andi %266, %267 : vector<2x16xi32>
    %269 = arith.ori %268, %183 : vector<2x16xi32>
    %cst_67 = arith.constant dense<-2147483648> : vector<2xi32>
    %270 = vector.multi_reduction <maxsi>, %269, %cst_67 [1] : vector<2x16xi32> to vector<2xi32>
    %271 = vector.shape_cast %270 : vector<2xi32> to vector<2x1xi32>
    %272 = vector.broadcast %271 : vector<2x1xi32> to vector<2x16xi32>
    %273 = arith.cmpi eq, %269, %272 : vector<2x16xi32>
    %274 = arith.extui %273 : vector<2x16xi1> to vector<2x16xi32>
    %275 = arith.sitofp %274 : vector<2x16xi32> to vector<2x16xf32>
    %276 = arith.truncf %275 : vector<2x16xf32> to vector<2x16xbf16>
    %cst_68 = arith.constant dense<0.000000e+00> : vector<2x128xf32>
    %277 = tpu.matmul %276, %1, %cst_68 {dimension_numbers = #tpu.dot_dimension_numbers<[1], [0], [0], [1], [0, 0, 1, 1], [], []>} : vector<2x16xbf16>, vector<16x128xbf16>, vector<2x128xf32> -> vector<2x128xf32>
    %278 = arith.addf %277, %260 : vector<2x128xf32>
    %279 = arith.negf %278 : vector<2x128xf32>
    %280 = math.exp %279 : vector<2x128xf32>
    %cst_69 = arith.constant 1.000000e+00 : f32
    %281 = vector.broadcast %cst_69 : f32 to vector<2x128xf32>
    %282 = arith.addf %281, %280 : vector<2x128xf32>
    %283 = arith.divf %281, %282 : vector<2x128xf32>
    %284 = vector.extract_strided_slice %283 {offsets = [0, 0], sizes = [2, 32], strides = [1, 1]} : vector<2x128xf32> to vector<2x32xf32>
    %285 = vector.extract_strided_slice %283 {offsets = [0, 32], sizes = [2, 32], strides = [1, 1]} : vector<2x128xf32> to vector<2x32xf32>
    %286 = vector.extract_strided_slice %283 {offsets = [0, 64], sizes = [2, 32], strides = [1, 1]} : vector<2x128xf32> to vector<2x32xf32>
    %cst_70 = arith.constant 2.000000e+00 : f32
    %287 = vector.broadcast %cst_70 : f32 to vector<2x32xf32>
    %288 = arith.mulf %287, %286 : vector<2x32xf32>
    %cst_71 = arith.constant 1.000000e+00 : f32
    %289 = vector.broadcast %cst_71 : f32 to vector<2x32xf32>
    %290 = arith.subf %288, %289 : vector<2x32xf32>
    %291 = vector.extract_strided_slice %283 {offsets = [0, 96], sizes = [2, 32], strides = [1, 1]} : vector<2x128xf32> to vector<2x32xf32>
    %292 = arith.mulf %285, %250 : vector<2x32xf32>
    %293 = arith.mulf %284, %290 : vector<2x32xf32>
    %294 = arith.addf %292, %293 : vector<2x32xf32>
    %295 = math.tanh %294 : vector<2x32xf32>
    %296 = arith.mulf %291, %295 : vector<2x32xf32>
    %297 = arith.truncf %296 : vector<2x32xf32> to vector<2x32xbf16>
    %cst_72 = arith.constant dense<0.000000e+00> : vector<2x16xf32>
    %298 = tpu.matmul %297, %3, %cst_72 {dimension_numbers = #tpu.dot_dimension_numbers<[1], [0], [0], [1], [0, 0, 1, 1], [], []>} : vector<2x32xbf16>, vector<32x16xbf16>, vector<2x16xf32> -> vector<2x16xf32>
    %299 = vector.broadcast %4 : vector<1x16xf32> to vector<2x16xf32>
    %300 = arith.addf %298, %299 : vector<2x16xf32>
    %c0_73 = arith.constant 0 : index
    %c2 = arith.constant 2 : index
    %c0_74 = arith.constant 0 : index
    %301 = vector.load %arg8[%c0_73, %c2, %c0_74] : memref<2x6x16xf32, #tpu.memory_space<vmem>>, vector<2x1x16xf32>
    %302 = vector.shape_cast %301 : vector<2x1x16xf32> to vector<2x16xf32>
    %303 = vector.shape_cast %300 : vector<2x16xf32> to vector<2x1x16xf32>
    tpu.vector_store %arg8[%c0_73, %c2, %c0_74], %303 {strides = array<i32>} : memref<2x6x16xf32, #tpu.memory_space<vmem>>, vector<2x1x16xf32>,
    %cst_75 = arith.constant dense<0.000000e+00> : vector<2x128xf32>
    %304 = tpu.matmul %297, %2, %cst_75 {dimension_numbers = #tpu.dot_dimension_numbers<[1], [0], [0], [1], [0, 0, 1, 1], [], []>} : vector<2x32xbf16>, vector<32x128xbf16>, vector<2x128xf32> -> vector<2x128xf32>
    %305 = tpu.bitcast %300 : vector<2x16xf32> -> vector<2x16xi32>
    %c0_i32_76 = arith.constant 0 : i32
    %306 = vector.broadcast %c0_i32_76 : i32 to vector<2x16xi32>
    %307 = arith.cmpi slt, %305, %306 : vector<2x16xi32>
    %c2147483647_i32_77 = arith.constant 2147483647 : i32
    %308 = vector.broadcast %c2147483647_i32_77 : i32 to vector<2x16xi32>
    %309 = arith.xori %305, %308 : vector<2x16xi32>
    %310 = arith.select %307, %309, %305 : vector<2x16xi1>, vector<2x16xi32>
    %c-16_i32_78 = arith.constant -16 : i32
    %311 = vector.broadcast %c-16_i32_78 : i32 to vector<2x16xi32>
    %312 = arith.andi %310, %311 : vector<2x16xi32>
    %313 = arith.ori %312, %183 : vector<2x16xi32>
    %cst_79 = arith.constant dense<-2147483648> : vector<2xi32>
    %314 = vector.multi_reduction <maxsi>, %313, %cst_79 [1] : vector<2x16xi32> to vector<2xi32>
    %315 = vector.shape_cast %314 : vector<2xi32> to vector<2x1xi32>
    %316 = vector.broadcast %315 : vector<2x1xi32> to vector<2x16xi32>
    %317 = arith.cmpi eq, %313, %316 : vector<2x16xi32>
    %318 = arith.extui %317 : vector<2x16xi1> to vector<2x16xi32>
    %319 = arith.sitofp %318 : vector<2x16xi32> to vector<2x16xf32>
    %320 = arith.truncf %319 : vector<2x16xf32> to vector<2x16xbf16>
    %cst_80 = arith.constant dense<0.000000e+00> : vector<2x128xf32>
    %321 = tpu.matmul %320, %1, %cst_80 {dimension_numbers = #tpu.dot_dimension_numbers<[1], [0], [0], [1], [0, 0, 1, 1], [], []>} : vector<2x16xbf16>, vector<16x128xbf16>, vector<2x128xf32> -> vector<2x128xf32>
    %322 = arith.addf %321, %304 : vector<2x128xf32>
    %323 = arith.negf %322 : vector<2x128xf32>
    %324 = math.exp %323 : vector<2x128xf32>
    %cst_81 = arith.constant 1.000000e+00 : f32
    %325 = vector.broadcast %cst_81 : f32 to vector<2x128xf32>
    %326 = arith.addf %325, %324 : vector<2x128xf32>
    %327 = arith.divf %325, %326 : vector<2x128xf32>
    %328 = vector.extract_strided_slice %327 {offsets = [0, 0], sizes = [2, 32], strides = [1, 1]} : vector<2x128xf32> to vector<2x32xf32>
    %329 = vector.extract_strided_slice %327 {offsets = [0, 32], sizes = [2, 32], strides = [1, 1]} : vector<2x128xf32> to vector<2x32xf32>
    %330 = vector.extract_strided_slice %327 {offsets = [0, 64], sizes = [2, 32], strides = [1, 1]} : vector<2x128xf32> to vector<2x32xf32>
    %cst_82 = arith.constant 2.000000e+00 : f32
    %331 = vector.broadcast %cst_82 : f32 to vector<2x32xf32>
    %332 = arith.mulf %331, %330 : vector<2x32xf32>
    %cst_83 = arith.constant 1.000000e+00 : f32
    %333 = vector.broadcast %cst_83 : f32 to vector<2x32xf32>
    %334 = arith.subf %332, %333 : vector<2x32xf32>
    %335 = vector.extract_strided_slice %327 {offsets = [0, 96], sizes = [2, 32], strides = [1, 1]} : vector<2x128xf32> to vector<2x32xf32>
    %336 = arith.mulf %329, %294 : vector<2x32xf32>
    %337 = arith.mulf %328, %334 : vector<2x32xf32>
    %338 = arith.addf %336, %337 : vector<2x32xf32>
    %339 = math.tanh %338 : vector<2x32xf32>
    %340 = arith.mulf %335, %339 : vector<2x32xf32>
    %341 = arith.truncf %340 : vector<2x32xf32> to vector<2x32xbf16>
    %cst_84 = arith.constant dense<0.000000e+00> : vector<2x16xf32>
    %342 = tpu.matmul %341, %3, %cst_84 {dimension_numbers = #tpu.dot_dimension_numbers<[1], [0], [0], [1], [0, 0, 1, 1], [], []>} : vector<2x32xbf16>, vector<32x16xbf16>, vector<2x16xf32> -> vector<2x16xf32>
    %343 = vector.broadcast %4 : vector<1x16xf32> to vector<2x16xf32>
    %344 = arith.addf %342, %343 : vector<2x16xf32>
    %c0_85 = arith.constant 0 : index
    %c3 = arith.constant 3 : index
    %c0_86 = arith.constant 0 : index
    %345 = vector.load %arg8[%c0_85, %c3, %c0_86] : memref<2x6x16xf32, #tpu.memory_space<vmem>>, vector<2x1x16xf32>
    %346 = vector.shape_cast %345 : vector<2x1x16xf32> to vector<2x16xf32>
    %347 = vector.shape_cast %344 : vector<2x16xf32> to vector<2x1x16xf32>
    tpu.vector_store %arg8[%c0_85, %c3, %c0_86], %347 {strides = array<i32>} : memref<2x6x16xf32, #tpu.memory_space<vmem>>, vector<2x1x16xf32>,
    %cst_87 = arith.constant dense<0.000000e+00> : vector<2x128xf32>
    %348 = tpu.matmul %341, %2, %cst_87 {dimension_numbers = #tpu.dot_dimension_numbers<[1], [0], [0], [1], [0, 0, 1, 1], [], []>} : vector<2x32xbf16>, vector<32x128xbf16>, vector<2x128xf32> -> vector<2x128xf32>
    %349 = tpu.bitcast %344 : vector<2x16xf32> -> vector<2x16xi32>
    %c0_i32_88 = arith.constant 0 : i32
    %350 = vector.broadcast %c0_i32_88 : i32 to vector<2x16xi32>
    %351 = arith.cmpi slt, %349, %350 : vector<2x16xi32>
    %c2147483647_i32_89 = arith.constant 2147483647 : i32
    %352 = vector.broadcast %c2147483647_i32_89 : i32 to vector<2x16xi32>
    %353 = arith.xori %349, %352 : vector<2x16xi32>
    %354 = arith.select %351, %353, %349 : vector<2x16xi1>, vector<2x16xi32>
    %c-16_i32_90 = arith.constant -16 : i32
    %355 = vector.broadcast %c-16_i32_90 : i32 to vector<2x16xi32>
    %356 = arith.andi %354, %355 : vector<2x16xi32>
    %357 = arith.ori %356, %183 : vector<2x16xi32>
    %cst_91 = arith.constant dense<-2147483648> : vector<2xi32>
    %358 = vector.multi_reduction <maxsi>, %357, %cst_91 [1] : vector<2x16xi32> to vector<2xi32>
    %359 = vector.shape_cast %358 : vector<2xi32> to vector<2x1xi32>
    %360 = vector.broadcast %359 : vector<2x1xi32> to vector<2x16xi32>
    %361 = arith.cmpi eq, %357, %360 : vector<2x16xi32>
    %362 = arith.extui %361 : vector<2x16xi1> to vector<2x16xi32>
    %363 = arith.sitofp %362 : vector<2x16xi32> to vector<2x16xf32>
    %364 = arith.truncf %363 : vector<2x16xf32> to vector<2x16xbf16>
    %cst_92 = arith.constant dense<0.000000e+00> : vector<2x128xf32>
    %365 = tpu.matmul %364, %1, %cst_92 {dimension_numbers = #tpu.dot_dimension_numbers<[1], [0], [0], [1], [0, 0, 1, 1], [], []>} : vector<2x16xbf16>, vector<16x128xbf16>, vector<2x128xf32> -> vector<2x128xf32>
    %366 = arith.addf %365, %348 : vector<2x128xf32>
    %367 = arith.negf %366 : vector<2x128xf32>
    %368 = math.exp %367 : vector<2x128xf32>
    %cst_93 = arith.constant 1.000000e+00 : f32
    %369 = vector.broadcast %cst_93 : f32 to vector<2x128xf32>
    %370 = arith.addf %369, %368 : vector<2x128xf32>
    %371 = arith.divf %369, %370 : vector<2x128xf32>
    %372 = vector.extract_strided_slice %371 {offsets = [0, 0], sizes = [2, 32], strides = [1, 1]} : vector<2x128xf32> to vector<2x32xf32>
    %373 = vector.extract_strided_slice %371 {offsets = [0, 32], sizes = [2, 32], strides = [1, 1]} : vector<2x128xf32> to vector<2x32xf32>
    %374 = vector.extract_strided_slice %371 {offsets = [0, 64], sizes = [2, 32], strides = [1, 1]} : vector<2x128xf32> to vector<2x32xf32>
    %cst_94 = arith.constant 2.000000e+00 : f32
    %375 = vector.broadcast %cst_94 : f32 to vector<2x32xf32>
    %376 = arith.mulf %375, %374 : vector<2x32xf32>
    %cst_95 = arith.constant 1.000000e+00 : f32
    %377 = vector.broadcast %cst_95 : f32 to vector<2x32xf32>
    %378 = arith.subf %376, %377 : vector<2x32xf32>
    %379 = vector.extract_strided_slice %371 {offsets = [0, 96], sizes = [2, 32], strides = [1, 1]} : vector<2x128xf32> to vector<2x32xf32>
    %380 = arith.mulf %373, %338 : vector<2x32xf32>
    %381 = arith.mulf %372, %378 : vector<2x32xf32>
    %382 = arith.addf %380, %381 : vector<2x32xf32>
    %383 = math.tanh %382 : vector<2x32xf32>
    %384 = arith.mulf %379, %383 : vector<2x32xf32>
    %385 = arith.truncf %384 : vector<2x32xf32> to vector<2x32xbf16>
    %cst_96 = arith.constant dense<0.000000e+00> : vector<2x16xf32>
    %386 = tpu.matmul %385, %3, %cst_96 {dimension_numbers = #tpu.dot_dimension_numbers<[1], [0], [0], [1], [0, 0, 1, 1], [], []>} : vector<2x32xbf16>, vector<32x16xbf16>, vector<2x16xf32> -> vector<2x16xf32>
    %387 = vector.broadcast %4 : vector<1x16xf32> to vector<2x16xf32>
    %388 = arith.addf %386, %387 : vector<2x16xf32>
    %c0_97 = arith.constant 0 : index
    %c4 = arith.constant 4 : index
    %c0_98 = arith.constant 0 : index
    %389 = vector.load %arg8[%c0_97, %c4, %c0_98] : memref<2x6x16xf32, #tpu.memory_space<vmem>>, vector<2x1x16xf32>
    %390 = vector.shape_cast %389 : vector<2x1x16xf32> to vector<2x16xf32>
    %391 = vector.shape_cast %388 : vector<2x16xf32> to vector<2x1x16xf32>
    tpu.vector_store %arg8[%c0_97, %c4, %c0_98], %391 {strides = array<i32>} : memref<2x6x16xf32, #tpu.memory_space<vmem>>, vector<2x1x16xf32>,
    %cst_99 = arith.constant dense<0.000000e+00> : vector<2x128xf32>
    %392 = tpu.matmul %385, %2, %cst_99 {dimension_numbers = #tpu.dot_dimension_numbers<[1], [0], [0], [1], [0, 0, 1, 1], [], []>} : vector<2x32xbf16>, vector<32x128xbf16>, vector<2x128xf32> -> vector<2x128xf32>
    %393 = tpu.bitcast %388 : vector<2x16xf32> -> vector<2x16xi32>
    %c0_i32_100 = arith.constant 0 : i32
    %394 = vector.broadcast %c0_i32_100 : i32 to vector<2x16xi32>
    %395 = arith.cmpi slt, %393, %394 : vector<2x16xi32>
    %c2147483647_i32_101 = arith.constant 2147483647 : i32
    %396 = vector.broadcast %c2147483647_i32_101 : i32 to vector<2x16xi32>
    %397 = arith.xori %393, %396 : vector<2x16xi32>
    %398 = arith.select %395, %397, %393 : vector<2x16xi1>, vector<2x16xi32>
    %c-16_i32_102 = arith.constant -16 : i32
    %399 = vector.broadcast %c-16_i32_102 : i32 to vector<2x16xi32>
    %400 = arith.andi %398, %399 : vector<2x16xi32>
    %401 = arith.ori %400, %183 : vector<2x16xi32>
    %cst_103 = arith.constant dense<-2147483648> : vector<2xi32>
    %402 = vector.multi_reduction <maxsi>, %401, %cst_103 [1] : vector<2x16xi32> to vector<2xi32>
    %403 = vector.shape_cast %402 : vector<2xi32> to vector<2x1xi32>
    %404 = vector.broadcast %403 : vector<2x1xi32> to vector<2x16xi32>
    %405 = arith.cmpi eq, %401, %404 : vector<2x16xi32>
    %406 = arith.extui %405 : vector<2x16xi1> to vector<2x16xi32>
    %407 = arith.sitofp %406 : vector<2x16xi32> to vector<2x16xf32>
    %408 = arith.truncf %407 : vector<2x16xf32> to vector<2x16xbf16>
    %cst_104 = arith.constant dense<0.000000e+00> : vector<2x128xf32>
    %409 = tpu.matmul %408, %1, %cst_104 {dimension_numbers = #tpu.dot_dimension_numbers<[1], [0], [0], [1], [0, 0, 1, 1], [], []>} : vector<2x16xbf16>, vector<16x128xbf16>, vector<2x128xf32> -> vector<2x128xf32>
    %410 = arith.addf %409, %392 : vector<2x128xf32>
    %411 = arith.negf %410 : vector<2x128xf32>
    %412 = math.exp %411 : vector<2x128xf32>
    %cst_105 = arith.constant 1.000000e+00 : f32
    %413 = vector.broadcast %cst_105 : f32 to vector<2x128xf32>
    %414 = arith.addf %413, %412 : vector<2x128xf32>
    %415 = arith.divf %413, %414 : vector<2x128xf32>
    %416 = vector.extract_strided_slice %415 {offsets = [0, 0], sizes = [2, 32], strides = [1, 1]} : vector<2x128xf32> to vector<2x32xf32>
    %417 = vector.extract_strided_slice %415 {offsets = [0, 32], sizes = [2, 32], strides = [1, 1]} : vector<2x128xf32> to vector<2x32xf32>
    %418 = vector.extract_strided_slice %415 {offsets = [0, 64], sizes = [2, 32], strides = [1, 1]} : vector<2x128xf32> to vector<2x32xf32>
    %cst_106 = arith.constant 2.000000e+00 : f32
    %419 = vector.broadcast %cst_106 : f32 to vector<2x32xf32>
    %420 = arith.mulf %419, %418 : vector<2x32xf32>
    %cst_107 = arith.constant 1.000000e+00 : f32
    %421 = vector.broadcast %cst_107 : f32 to vector<2x32xf32>
    %422 = arith.subf %420, %421 : vector<2x32xf32>
    %423 = vector.extract_strided_slice %415 {offsets = [0, 96], sizes = [2, 32], strides = [1, 1]} : vector<2x128xf32> to vector<2x32xf32>
    %424 = arith.mulf %417, %382 : vector<2x32xf32>
    %425 = arith.mulf %416, %422 : vector<2x32xf32>
    %426 = arith.addf %424, %425 : vector<2x32xf32>
    %427 = math.tanh %426 : vector<2x32xf32>
    %428 = arith.mulf %423, %427 : vector<2x32xf32>
    %429 = arith.truncf %428 : vector<2x32xf32> to vector<2x32xbf16>
    %cst_108 = arith.constant dense<0.000000e+00> : vector<2x16xf32>
    %430 = tpu.matmul %429, %3, %cst_108 {dimension_numbers = #tpu.dot_dimension_numbers<[1], [0], [0], [1], [0, 0, 1, 1], [], []>} : vector<2x32xbf16>, vector<32x16xbf16>, vector<2x16xf32> -> vector<2x16xf32>
    %431 = vector.broadcast %4 : vector<1x16xf32> to vector<2x16xf32>
    %432 = arith.addf %430, %431 : vector<2x16xf32>
    %c0_109 = arith.constant 0 : index
    %c5 = arith.constant 5 : index
    %c0_110 = arith.constant 0 : index
    %433 = vector.load %arg8[%c0_109, %c5, %c0_110] : memref<2x6x16xf32, #tpu.memory_space<vmem>>, vector<2x1x16xf32>
    %434 = vector.shape_cast %433 : vector<2x1x16xf32> to vector<2x16xf32>
    %435 = vector.shape_cast %432 : vector<2x16xf32> to vector<2x1x16xf32>
    tpu.vector_store %arg8[%c0_109, %c5, %c0_110], %435 {strides = array<i32>} : memref<2x6x16xf32, #tpu.memory_space<vmem>>, vector<2x1x16xf32>,
    return
  }
}

</mosaic_0001>

<llo_original>
// kernel: autoregressive_lstm.1
$region0: #{autoregressive_lstm.1}
  #allocation0 [shape = 'u32[]', space=smem, size = 0x4, offset = 0x4, fixed_abs, tag = 'smem constant byte address 0x4 - core index']
  #allocation1 [shape = 'u32[72,128]{1,0:T(1,128)}', space=vmem, size = 0x9000, scoped, tag = 'internal scratch']
  %s0 = inlined_call_operand.vmem [shape: bf16[16,4], index: 0, kind: input, shape index: {}]
  %s1 = inlined_call_operand.vmem [shape: bf16[4,128], index: 1, kind: input, shape index: {}]
  %s2 = inlined_call_operand.vmem [shape: bf16[32,128], index: 2, kind: input, shape index: {}]
  %s3 = inlined_call_operand.hbm [shape: f32[1,128], index: 3, kind: input, shape index: {}]
  %s4 = inlined_call_operand.vmem [shape: bf16[16,128], index: 4, kind: input, shape index: {}]
  %s5 = inlined_call_operand.vmem [shape: bf16[32,128], index: 5, kind: input, shape index: {}]
  %s6 = inlined_call_operand.vmem [shape: bf16[32,16], index: 6, kind: input, shape index: {}]
  %s7 = inlined_call_operand.hbm [shape: f32[1,16], index: 7, kind: input, shape index: {}]
  %s8 = inlined_call_operand.vmem [shape: f32[2,6,16], index: 8, kind: output, shape index: {}]
  %s9 = sld [smem:[#allocation0]]
  $region50: #{autoregressive_lstm.1} parent=0
    _
  %s11 = ssub.s32 1, %s9
  %s12 = scalar_select 0, %s11, %s9
  $region1: #{autoregressive_lstm.1} parent=0
    #allocation2 [shape = 'u8[512]{0}', space=vmem, size = 0x400, scoped, tag = 'input window, operand 3, single buffered']
    #allocation3 [shape = 's32[1]{0}', space=sflag, size = 0x4, scoped, tag = 'scoped memory for autoregressive_lstm.1']
    #allocation4 [shape = 'u8[512]{0}', space=vmem, size = 0x400, scoped, tag = 'input window, operand 7, single buffered']
    #allocation5 [shape = 's32[1]{0}', space=sflag, size = 0x4, scoped, tag = 'scoped memory for autoregressive_lstm.1']
    %13 = vsyncpa [#allocation3], 0
    %14 = vsyncpa [#allocation5], 0
    // Predicated region
    $region2: #{autoregressive_lstm.1} parent=1 // pred_check
      _
    $region3: #{autoregressive_lstm.1} parent=1 // pred_check_branch
      %16 = sbr.rel (0) target = $region5
    $region4: #{autoregressive_lstm.1} parent=1 // pred_region
      _
    $region5: #{autoregressive_lstm.1} parent=1 // pred_fallthru
      _
    // Predicated region
    $region6: #{autoregressive_lstm.1} parent=1 // pred_check
      _
    $region7: #{autoregressive_lstm.1} parent=1 // pred_check_branch
      %18 = sbr.rel (0) target = $region9
    $region8: #{autoregressive_lstm.1} parent=1 // pred_region
      _
    $region9: #{autoregressive_lstm.1} parent=1 // pred_fallthru
      _
    // Predicated region
    $region10: #{autoregressive_lstm.1} parent=1 // pred_check
      _
    $region11: #{autoregressive_lstm.1} parent=1 // pred_check_branch
      %20 = sbr.rel (0) target = $region13
    $region12: #{autoregressive_lstm.1} parent=1 // pred_region
      _
    $region13: #{autoregressive_lstm.1} parent=1 // pred_fallthru
      _
    // Predicated region
    $region14: #{autoregressive_lstm.1} parent=1 // pred_check
      _
    $region15: #{autoregressive_lstm.1} parent=1 // pred_check_branch
      %22 = sbr.rel (0) target = $region17
    $region16: #{autoregressive_lstm.1} parent=1 // pred_region
      %24 = vsyncadd [#allocation3], 0
      %s26 = sshll.u32 %s3, 4
      %s27 = int_to_ptr.hbm [resolvable:$true] %s26
      %s28 = sshll.u32 [#allocation2], 4
      %s29 = int_to_ptr.vmem [resolvable:$true] %s28
      %31 = dma.hbm_to_vmem [thread:$0]  %s27, 16, %s29, [#allocation3]
    $region17: #{autoregressive_lstm.1} parent=1 // pred_fallthru
      _
    // Predicated region
    $region18: #{autoregressive_lstm.1} parent=1 // pred_check
      _
    $region19: #{autoregressive_lstm.1} parent=1 // pred_check_branch
      %33 = sbr.rel (0) target = $region21
    $region20: #{autoregressive_lstm.1} parent=1 // pred_region
      _
    $region21: #{autoregressive_lstm.1} parent=1 // pred_fallthru
      _
    // Predicated region
    $region22: #{autoregressive_lstm.1} parent=1 // pred_check
      _
    $region23: #{autoregressive_lstm.1} parent=1 // pred_check_branch
      %35 = sbr.rel (0) target = $region25
    $region24: #{autoregressive_lstm.1} parent=1 // pred_region
      _
    $region25: #{autoregressive_lstm.1} parent=1 // pred_fallthru
      _
    // Predicated region
    $region26: #{autoregressive_lstm.1} parent=1 // pred_check
      _
    $region27: #{autoregressive_lstm.1} parent=1 // pred_check_branch
      %37 = sbr.rel (0) target = $region29
    $region28: #{autoregressive_lstm.1} parent=1 // pred_region
      _
    $region29: #{autoregressive_lstm.1} parent=1 // pred_fallthru
      _
    // Predicated region
    $region30: #{autoregressive_lstm.1} parent=1 // pred_check
      _
    $region31: #{autoregressive_lstm.1} parent=1 // pred_check_branch
      %39 = sbr.rel (0) target = $region33
    $region32: #{autoregressive_lstm.1} parent=1 // pred_region
      %41 = vsyncadd [#allocation5], 0
      %s43 = sshll.u32 %s7, 4
      %s44 = int_to_ptr.hbm [resolvable:$true] %s43
      %s45 = sshll.u32 [#allocation4], 4
      %s46 = int_to_ptr.vmem [resolvable:$true] %s45
      %48 = dma.hbm_to_vmem [thread:$0]  %s44, 16, %s46, [#allocation5]
    $region33: #{autoregressive_lstm.1} parent=1 // pred_fallthru
      _
    // Predicated region
    $region34: #{autoregressive_lstm.1} parent=1 // pred_check
      _
    $region35: #{autoregressive_lstm.1} parent=1 // pred_check_branch
      %50 = sbr.rel (0) target = $region37
    $region36: #{autoregressive_lstm.1} parent=1 // pred_region
      %52 = dma.done [#allocation3], 16
    $region37: #{autoregressive_lstm.1} parent=1 // pred_fallthru
      _
    // Predicated region
    $region38: #{autoregressive_lstm.1} parent=1 // pred_check
      _
    $region39: #{autoregressive_lstm.1} parent=1 // pred_check_branch
      %54 = sbr.rel (0) target = $region41
    $region40: #{autoregressive_lstm.1} parent=1 // pred_region
      %56 = dma.done [#allocation5], 16
    $region41: #{autoregressive_lstm.1} parent=1 // pred_fallthru
      _
    %v58 = vld [vmem:[%s2] sm:$0xf]
    %v59 = vld [vmem:[%s2 + $0x4] sm:$0xf]
    %v60 = vld [vmem:[%s2 + $0x8] sm:$0xf]
    %v61 = vld [vmem:[%s2 + $0xc] sm:$0xf]
    %v62 = vld [vmem:[%s4] sm:$0xf]
    %v63 = vld [vmem:[%s4 + $0x4] sm:$0xf]
    %v64 = vld [vmem:[%s5] sm:$0xf]
    %v65 = vld [vmem:[%s5 + $0x4] sm:$0xf]
    %v66 = vld [vmem:[%s5 + $0x8] sm:$0xf]
    %v67 = vld [vmem:[%s5 + $0xc] sm:$0xf]
    %v68 = vld [vmem:[%s6] sm:$0xf]
    %v69 = vld [vmem:[%s6 + $0x4] sm:$0xf]
    %v70 = vld [vmem:[%s6 + $0x8] sm:$0xf]
    %v71 = vld [vmem:[%s6 + $0xc] sm:$0xf]
    %v72 = vld [vmem:[#allocation4] sm:$0x1]
    %v73 = vld [vmem:[%s0] sm:$0xf]
    %v74 = vld [vmem:[%s0 + $0x4] sm:$0xf]
    %v75 = vld [vmem:[%s1] sm:$0x3]
    %v76 = vld [vmem:[#allocation2] sm:$0x1]
    %v78 = vperm.slane %v76, 0
    %v82 = vunpack.c.l.b16 %v73
    %v83 = vunpack.c.l.b16 %v74
    %v84 = vpack.c.b16 %v83, %v82
    %vm85 = vcmask 31744
    %v87 = vsel %vm85, %v84, 0
    %vm89 = vcmask 1041408
    %v91 = vsel %vm89, %v75, 0
    %93 = vmatpush.bf16.msra.mxu0 0
    %94 = vmatpush.bf16.msra.mxu0 0
    %95 = vmatpush.bf16.msra.mxu0 0
    %96 = vmatpush.bf16.msra.mxu0 0
    %97 = vmatpush.bf16.msra.mxu0 0
    %98 = vmatpush.bf16.msra.mxu0 0
    %99 = vmatpush.bf16.msra.mxu0 0
    %100 = vmatpush.bf16.msra.mxu0 %v91
    %101 = vmatmul.bf16.gmra.mxu0 %v87
    %v102 = vpop.f32.mrf.mxu0
    %v103 = vadd.f32 %v78, %v102
    %v104 = vpop.f32.mrf.mxu0
    %v105 = vadd.f32 %v78, %v104
    %106 = vdwg.mxu0
    %v107 = vxor.u32 %v103, 2147483648
    %v108 = vmul.f32 %v107, 1.442695
    %v109 = vpow.pop %v108
    %v110 = vadd.f32 %v109, 1.0
    %v111 = vrcp.pop %v110
    %v112 = vmul.f32 %v110, %v111
    %v113 = vsub.f32 1.0, %v112
    %v114 = vmul.f32 %v111, %v113
    %v115 = vadd.f32 %v111, %v114
    %vm116 = vweird.f32 %v110
    %vm117 = vweird.f32 %v111
    %vm118 = vmor %vm116, %vm117
    %v119 = vsel %vm118, %v111, %v115
    %v120 = vand.u32 2147483647, %v110
    %vm121 = vcmp.eq.f32.partialorder %v120, 8.507059e+37
    %v122 = vand.u32 %v110, 2147483648
    %v123 = vor.u32 1.1754944e-38, %v122
    %v124 = vsel %vm121, %v123, %v119
    %v125 = vmul.f32 1.0, %v124
    %v126 = vmul.f32 %v125, 2.0
    %v127 = vsub.f32 %v126, 1.0
    %129 = vrot.lane.b32.xlu0 %v127, 64
    %v130 = vpop.permute.xlu0 %129
    %v132 = vmul.f32 %v125, %v130
    %v133 = vtanh.pop %v132
    %135 = vrot.lane.b32.xlu0 %v133, 96
    %v136 = vpop.permute.xlu0 %135
    %v138 = vmul.f32 %v125, %v136
    %v139 = vpack.c.bf16 %v138, %v138
    %141 = vrot.lane.b32.xlu0 %v139, 32
    %v142 = vpop.permute.xlu0 %141
    %v147 = vunpack.c.l.b16 %v58
    %v148 = vunpack.c.l.b16 %v59
    %v149 = vunpack.c.l.b16 %v60
    %v150 = vunpack.c.l.b16 %v61
    %v151 = vpack.c.b16 %v148, %v147
    %v152 = vpack.c.b16 %v150, %v149
    %vm155 = vcmask 261120
    %v157 = vsel %vm155, %v142, 0
    %159 = vmatpush.bf16.msra.mxu0 0
    %160 = vmatpush.bf16.msra.mxu0 0
    %161 = vmatpush.bf16.msra.mxu0 0
    %162 = vmatpush.bf16.msra.mxu0 0
    %163 = vmatpush.bf16.msra.mxu0 0
    %164 = vmatpush.bf16.msra.mxu0 0
    %165 = vmatpush.bf16.msra.mxu0 %v152
    %166 = vmatpush.bf16.msra.mxu0 %v151
    %167 = vmatmul.bf16.gmra.mxu0 %v157
    %v168 = vpop.f32.mrf.mxu0
    %v169 = vadd.f32 0.0, %v168
    %v170 = vpop.f32.mrf.mxu0
    %171 = vdwg.mxu0
    %v173 = vrot.slane %v169, 6
    %v175 = vadd.f32 %v103, %v173
    %v176 = vxor.u32 %v175, 2147483648
    %v177 = vmul.f32 %v176, 1.442695
    %v178 = vpow.pop %v177
    %v179 = vadd.f32 %v178, 1.0
    %v180 = vrcp.pop %v179
    %v181 = vmul.f32 %v179, %v180
    %v182 = vsub.f32 1.0, %v181
    %v183 = vmul.f32 %v180, %v182
    %v184 = vadd.f32 %v180, %v183
    %vm185 = vweird.f32 %v179
    %vm186 = vweird.f32 %v180
    %vm187 = vmor %vm185, %vm186
    %v188 = vsel %vm187, %v180, %v184
    %v189 = vand.u32 2147483647, %v179
    %vm190 = vcmp.eq.f32.partialorder %v189, 8.507059e+37
    %v191 = vand.u32 %v179, 2147483648
    %v192 = vor.u32 1.1754944e-38, %v191
    %v193 = vsel %vm190, %v192, %v188
    %v194 = vmul.f32 1.0, %v193
    %v195 = vmul.f32 %v194, 2.0
    %v196 = vsub.f32 %v195, 1.0
    %v198 = vrot.slane %v132, 6
    %199 = vrot.lane.b32.xlu0 %v198, 32
    %v200 = vpop.permute.xlu0 %199
    %v202 = vmul.f32 %v194, %v200
    %204 = vrot.lane.b32.xlu0 %v196, 64
    %v205 = vpop.permute.xlu0 %204
    %v207 = vmul.f32 %v194, %v205
    %209 = vrot.lane.b32.xlu0 %v207, 32
    %v210 = vpop.permute.xlu0 %209
    %v212 = vadd.f32 %v202, %v210
    %v213 = vtanh.pop %v212
    %215 = vrot.lane.b32.xlu0 %v213, 64
    %v216 = vpop.permute.xlu0 %215
    %v218 = vmul.f32 %v194, %v216
    %v219 = vpack.c.bf16 %v218, %v218
    %v221 = vrot.slane %v219, 1
    %222 = vrot.lane.b32.xlu0 %v221, 32
    %v223 = vpop.permute.xlu0 %222
    %v225 = vsel %vm155, %v223, 0
    %227 = vmatpush.bf16.msra.mxu0 0
    %228 = vmatpush.bf16.msra.mxu0 0
    %229 = vmatpush.bf16.msra.mxu0 0
    %230 = vmatpush.bf16.msra.mxu0 0
    %231 = vmatpush.bf16.msra.mxu0 0
    %232 = vmatpush.bf16.msra.mxu0 0
    %233 = vmatpush.bf16.msra.mxu0 %v152
    %234 = vmatpush.bf16.msra.mxu0 %v151
    %235 = vmatmul.bf16.gmra.mxu0 %v225
    %v236 = vpop.f32.mrf.mxu0
    %v237 = vadd.f32 0.0, %v236
    %v238 = vpop.f32.mrf.mxu0
    %239 = vdwg.mxu0
    %v241 = vrot.slane %v237, 4
    %v243 = vadd.f32 %v103, %v241
    %v244 = vxor.u32 %v243, 2147483648
    %v245 = vmul.f32 %v244, 1.442695
    %v246 = vpow.pop %v245
    %v247 = vadd.f32 %v246, 1.0
    %v248 = vrcp.pop %v247
    %v249 = vmul.f32 %v247, %v248
    %v250 = vsub.f32 1.0, %v249
    %v251 = vmul.f32 %v248, %v250
    %v252 = vadd.f32 %v248, %v251
    %vm253 = vweird.f32 %v247
    %vm254 = vweird.f32 %v248
    %vm255 = vmor %vm253, %vm254
    %v256 = vsel %vm255, %v248, %v252
    %v257 = vand.u32 2147483647, %v247
    %vm258 = vcmp.eq.f32.partialorder %v257, 8.507059e+37
    %v259 = vand.u32 %v247, 2147483648
    %v260 = vor.u32 1.1754944e-38, %v259
    %v261 = vsel %vm258, %v260, %v256
    %v262 = vmul.f32 1.0, %v261
    %v263 = vmul.f32 %v262, 2.0
    %v264 = vsub.f32 %v263, 1.0
    %v266 = vrot.slane %v212, 6
    %v268 = vmul.f32 %v262, %v266
    %270 = vrot.lane.b32.xlu0 %v264, 64
    %v271 = vpop.permute.xlu0 %270
    %v273 = vmul.f32 %v262, %v271
    %275 = vrot.lane.b32.xlu0 %v273, 32
    %v276 = vpop.permute.xlu0 %275
    %v278 = vadd.f32 %v268, %v276
    %v279 = vtanh.pop %v278
    %281 = vrot.lane.b32.xlu0 %v279, 64
    %v282 = vpop.permute.xlu0 %281
    %v284 = vmul.f32 %v262, %v282
    %v285 = vpack.c.bf16 %v284, %v284
    %v287 = vrot.slane %v285, 2
    %288 = vrot.lane.b32.xlu0 %v287, 32
    %v289 = vpop.permute.xlu0 %288
    %v291 = vsel %vm155, %v289, 0
    %293 = vmatpush.bf16.msra.mxu0 0
    %294 = vmatpush.bf16.msra.mxu0 0
    %295 = vmatpush.bf16.msra.mxu0 0
    %296 = vmatpush.bf16.msra.mxu0 0
    %297 = vmatpush.bf16.msra.mxu0 0
    %298 = vmatpush.bf16.msra.mxu0 0
    %299 = vmatpush.bf16.msra.mxu0 %v152
    %300 = vmatpush.bf16.msra.mxu0 %v151
    %301 = vmatmul.bf16.gmra.mxu0 %v291
    %v302 = vpop.f32.mrf.mxu0
    %v303 = vadd.f32 0.0, %v302
    %v304 = vpop.f32.mrf.mxu0
    %305 = vdwg.mxu0
    %v307 = vrot.slane %v303, 2
    %v309 = vadd.f32 %v103, %v307
    %v310 = vxor.u32 %v309, 2147483648
    %v311 = vmul.f32 %v310, 1.442695
    %v312 = vpow.pop %v311
    %v313 = vadd.f32 %v312, 1.0
    %v314 = vrcp.pop %v313
    %v315 = vmul.f32 %v313, %v314
    %v316 = vsub.f32 1.0, %v315
    %v317 = vmul.f32 %v314, %v316
    %v318 = vadd.f32 %v314, %v317
    %vm319 = vweird.f32 %v313
    %vm320 = vweird.f32 %v314
    %vm321 = vmor %vm319, %vm320
    %v322 = vsel %vm321, %v314, %v318
    %v323 = vand.u32 2147483647, %v313
    %vm324 = vcmp.eq.f32.partialorder %v323, 8.507059e+37
    %v325 = vand.u32 %v313, 2147483648
    %v326 = vor.u32 1.1754944e-38, %v325
    %v327 = vsel %vm324, %v326, %v322
    %v328 = vmul.f32 1.0, %v327
    %v329 = vmul.f32 %v328, 2.0
    %v330 = vsub.f32 %v329, 1.0
    %v332 = vrot.slane %v278, 6
    %v334 = vmul.f32 %v328, %v332
    %336 = vrot.lane.b32.xlu0 %v330, 64
    %v337 = vpop.permute.xlu0 %336
    %v339 = vmul.f32 %v328, %v337
    %341 = vrot.lane.b32.xlu0 %v339, 32
    %v342 = vpop.permute.xlu0 %341
    %v344 = vadd.f32 %v334, %v342
    %v345 = vtanh.pop %v344
    %347 = vrot.lane.b32.xlu0 %v345, 64
    %v348 = vpop.permute.xlu0 %347
    %v350 = vmul.f32 %v328, %v348
    %v351 = vpack.c.bf16 %v350, %v350
    %v353 = vrot.slane %v351, 3
    %354 = vrot.lane.b32.xlu0 %v353, 32
    %v355 = vpop.permute.xlu0 %354
    %v357 = vsel %vm155, %v355, 0
    %359 = vmatpush.bf16.msra.mxu0 0
    %360 = vmatpush.bf16.msra.mxu0 0
    %361 = vmatpush.bf16.msra.mxu0 0
    %362 = vmatpush.bf16.msra.mxu0 0
    %363 = vmatpush.bf16.msra.mxu0 0
    %364 = vmatpush.bf16.msra.mxu0 0
    %365 = vmatpush.bf16.msra.mxu0 %v152
    %366 = vmatpush.bf16.msra.mxu0 %v151
    %367 = vmatmul.bf16.gmra.mxu0 %v357
    %v368 = vpop.f32.mrf.mxu0
    %v369 = vadd.f32 0.0, %v368
    %v370 = vpop.f32.mrf.mxu0
    %371 = vdwg.mxu0
    %v372 = vadd.f32 %v105, %v369
    %v373 = vxor.u32 %v372, 2147483648
    %v374 = vmul.f32 %v373, 1.442695
    %v375 = vpow.pop %v374
    %v376 = vadd.f32 %v375, 1.0
    %v377 = vrcp.pop %v376
    %v378 = vmul.f32 %v376, %v377
    %v379 = vsub.f32 1.0, %v378
    %v380 = vmul.f32 %v377, %v379
    %v381 = vadd.f32 %v377, %v380
    %vm382 = vweird.f32 %v376
    %vm383 = vweird.f32 %v377
    %vm384 = vmor %vm382, %vm383
    %v385 = vsel %vm384, %v377, %v381
    %v386 = vand.u32 2147483647, %v376
    %vm387 = vcmp.eq.f32.partialorder %v386, 8.507059e+37
    %v388 = vand.u32 %v376, 2147483648
    %v389 = vor.u32 1.1754944e-38, %v388
    %v390 = vsel %vm387, %v389, %v385
    %v391 = vmul.f32 1.0, %v390
    %v392 = vmul.f32 %v391, 2.0
    %v393 = vsub.f32 %v392, 1.0
    %v395 = vrot.slane %v344, 6
    %v397 = vmul.f32 %v391, %v395
    %399 = vrot.lane.b32.xlu0 %v393, 64
    %v400 = vpop.permute.xlu0 %399
    %v402 = vmul.f32 %v391, %v400
    %404 = vrot.lane.b32.xlu0 %v402, 32
    %v405 = vpop.permute.xlu0 %404
    %v407 = vadd.f32 %v397, %v405
    %v408 = vtanh.pop %v407
    %410 = vrot.lane.b32.xlu0 %v408, 64
    %v411 = vpop.permute.xlu0 %410
    %v413 = vmul.f32 %v391, %v411
    %v414 = vpack.c.bf16 %v413, %v413
    %416 = vrot.lane.b32.xlu0 %v414, 32
    %v417 = vpop.permute.xlu0 %416
    %v419 = vsel %vm155, %v417, 0
    %421 = vmatpush.bf16.msra.mxu0 0
    %422 = vmatpush.bf16.msra.mxu0 0
    %423 = vmatpush.bf16.msra.mxu0 0
    %424 = vmatpush.bf16.msra.mxu0 0
    %425 = vmatpush.bf16.msra.mxu0 0
    %426 = vmatpush.bf16.msra.mxu0 0
    %427 = vmatpush.bf16.msra.mxu0 %v152
    %428 = vmatpush.bf16.msra.mxu0 %v151
    %429 = vmatmul.bf16.gmra.mxu0 %v419
    %v430 = vpop.f32.mrf.mxu0
    %v431 = vadd.f32 0.0, %v430
    %v432 = vpop.f32.mrf.mxu0
    %433 = vdwg.mxu0
    %v435 = vrot.slane %v431, 6
    %v437 = vadd.f32 %v105, %v435
    %v438 = vxor.u32 %v437, 2147483648
    %v439 = vmul.f32 %v438, 1.442695
    %v440 = vpow.pop %v439
    %v441 = vadd.f32 %v440, 1.0
    %v442 = vrcp.pop %v441
    %v443 = vmul.f32 %v441, %v442
    %v444 = vsub.f32 1.0, %v443
    %v445 = vmul.f32 %v442, %v444
    %v446 = vadd.f32 %v442, %v445
    %vm447 = vweird.f32 %v441
    %vm448 = vweird.f32 %v442
    %vm449 = vmor %vm447, %vm448
    %v450 = vsel %vm449, %v442, %v446
    %v451 = vand.u32 2147483647, %v441
    %vm452 = vcmp.eq.f32.partialorder %v451, 8.507059e+37
    %v453 = vand.u32 %v441, 2147483648
    %v454 = vor.u32 1.1754944e-38, %v453
    %v455 = vsel %vm452, %v454, %v450
    %v456 = vmul.f32 1.0, %v455
    %v457 = vmul.f32 %v456, 2.0
    %v458 = vsub.f32 %v457, 1.0
    %v460 = vrot.slane %v407, 6
    %v462 = vmul.f32 %v456, %v460
    %464 = vrot.lane.b32.xlu0 %v458, 64
    %v465 = vpop.permute.xlu0 %464
    %v467 = vmul.f32 %v456, %v465
    %469 = vrot.lane.b32.xlu0 %v467, 32
    %v470 = vpop.permute.xlu0 %469
    %v472 = vadd.f32 %v462, %v470
    %v473 = vtanh.pop %v472
    %475 = vrot.lane.b32.xlu0 %v473, 64
    %v476 = vpop.permute.xlu0 %475
    %v478 = vmul.f32 %v456, %v476
    %v479 = vpack.c.bf16 %v478, %v478
    %v481 = vrot.slane %v479, 1
    %482 = vrot.lane.b32.xlu0 %v481, 32
    %v483 = vpop.permute.xlu0 %482
    %v485 = vsel %vm155, %v483, 0
    %487 = vmatpush.bf16.msra.mxu0 0
    %488 = vmatpush.bf16.msra.mxu0 0
    %489 = vmatpush.bf16.msra.mxu0 0
    %490 = vmatpush.bf16.msra.mxu0 0
    %491 = vmatpush.bf16.msra.mxu0 0
    %492 = vmatpush.bf16.msra.mxu0 0
    %493 = vmatpush.bf16.msra.mxu0 %v152
    %494 = vmatpush.bf16.msra.mxu0 %v151
    %495 = vmatmul.bf16.gmra.mxu0 %v485
    %v496 = vpop.f32.mrf.mxu0
    %v497 = vadd.f32 0.0, %v496
    %v498 = vpop.f32.mrf.mxu0
    %499 = vdwg.mxu0
    %v501 = vrot.slane %v497, 4
    %v503 = vadd.f32 %v105, %v501
    %v504 = vxor.u32 %v503, 2147483648
    %v505 = vmul.f32 %v504, 1.442695
    %v506 = vpow.pop %v505
    %v507 = vadd.f32 %v506, 1.0
    %v508 = vrcp.pop %v507
    %v509 = vmul.f32 %v507, %v508
    %v510 = vsub.f32 1.0, %v509
    %v511 = vmul.f32 %v508, %v510
    %v512 = vadd.f32 %v508, %v511
    %vm513 = vweird.f32 %v507
    %vm514 = vweird.f32 %v508
    %vm515 = vmor %vm513, %vm514
    %v516 = vsel %vm515, %v508, %v512
    %v517 = vand.u32 2147483647, %v507
    %vm518 = vcmp.eq.f32.partialorder %v517, 8.507059e+37
    %v519 = vand.u32 %v507, 2147483648
    %v520 = vor.u32 1.1754944e-38, %v519
    %v521 = vsel %vm518, %v520, %v516
    %v522 = vmul.f32 1.0, %v521
    %v523 = vmul.f32 %v522, 2.0
    %v524 = vsub.f32 %v523, 1.0
    %v526 = vrot.slane %v472, 6
    %v528 = vmul.f32 %v522, %v526
    %530 = vrot.lane.b32.xlu0 %v524, 64
    %v531 = vpop.permute.xlu0 %530
    %v533 = vmul.f32 %v522, %v531
    %535 = vrot.lane.b32.xlu0 %v533, 32
    %v536 = vpop.permute.xlu0 %535
    %v538 = vadd.f32 %v528, %v536
    %v539 = vtanh.pop %v538
    %541 = vrot.lane.b32.xlu0 %v539, 64
    %v542 = vpop.permute.xlu0 %541
    %v544 = vmul.f32 %v522, %v542
    %v545 = vpack.c.bf16 %v544, %v544
    %v547 = vrot.slane %v545, 2
    %548 = vrot.lane.b32.xlu0 %v547, 32
    %v549 = vpop.permute.xlu0 %548
    %v551 = vsel %vm155, %v549, 0
    %553 = vmatpush.bf16.msra.mxu0 0
    %554 = vmatpush.bf16.msra.mxu0 0
    %555 = vmatpush.bf16.msra.mxu0 0
    %556 = vmatpush.bf16.msra.mxu0 0
    %557 = vmatpush.bf16.msra.mxu0 0
    %558 = vmatpush.bf16.msra.mxu0 0
    %559 = vmatpush.bf16.msra.mxu0 %v152
    %560 = vmatpush.bf16.msra.mxu0 %v151
    %561 = vmatmul.bf16.gmra.mxu0 %v551
    %v562 = vpop.f32.mrf.mxu0
    %v563 = vadd.f32 0.0, %v562
    %v564 = vpop.f32.mrf.mxu0
    %565 = vdwg.mxu0
    %v567 = vrot.slane %v563, 2
    %v569 = vadd.f32 %v105, %v567
    %v570 = vxor.u32 %v569, 2147483648
    %v571 = vmul.f32 %v570, 1.442695
    %v572 = vpow.pop %v571
    %v573 = vadd.f32 %v572, 1.0
    %v574 = vrcp.pop %v573
    %v575 = vmul.f32 %v573, %v574
    %v576 = vsub.f32 1.0, %v575
    %v577 = vmul.f32 %v574, %v576
    %v578 = vadd.f32 %v574, %v577
    %vm579 = vweird.f32 %v573
    %vm580 = vweird.f32 %v574
    %vm581 = vmor %vm579, %vm580
    %v582 = vsel %vm581, %v574, %v578
    %v583 = vand.u32 2147483647, %v573
    %vm584 = vcmp.eq.f32.partialorder %v583, 8.507059e+37
    %v585 = vand.u32 %v573, 2147483648
    %v586 = vor.u32 1.1754944e-38, %v585
    %v587 = vsel %vm584, %v586, %v582
    %v588 = vmul.f32 1.0, %v587
    %v589 = vmul.f32 %v588, 2.0
    %v590 = vsub.f32 %v589, 1.0
    %v592 = vrot.slane %v538, 6
    %v594 = vmul.f32 %v588, %v592
    %596 = vrot.lane.b32.xlu0 %v590, 64
    %v597 = vpop.permute.xlu0 %596
    %v599 = vmul.f32 %v588, %v597
    %601 = vrot.lane.b32.xlu0 %v599, 32
    %v602 = vpop.permute.xlu0 %601
    %v604 = vadd.f32 %v594, %v602
    %v605 = vtanh.pop %v604
    %607 = vrot.lane.b32.xlu0 %v605, 64
    %v608 = vpop.permute.xlu0 %607
    %v610 = vmul.f32 %v588, %v608
    %v611 = vlaneseq
    %v612 = vand.u32 %v611, 127
    %v613 = vsub.s32 15, %v612
    %v614 = vunpack.c.l.bf16 %v62
    %v615 = vperm.slane %v614, 0
    %v616 = vpack.c.bf16 %v610, %v610
    %v618 = vrot.slane %v616, 3
    %619 = vrot.lane.b32.xlu0 %v618, 32
    %v620 = vpop.permute.xlu0 %619
    %v625 = vunpack.c.l.b16 %v64
    %v626 = vunpack.c.l.b16 %v65
    %v627 = vunpack.c.l.b16 %v66
    %v628 = vunpack.c.l.b16 %v67
    %v629 = vpack.c.b16 %v626, %v625
    %v630 = vpack.c.b16 %v628, %v627
    %v634 = vsel %vm155, %v620, 0
    %636 = vmatpush.bf16.msra.mxu0 0
    %637 = vmatpush.bf16.msra.mxu0 0
    %638 = vmatpush.bf16.msra.mxu0 0
    %639 = vmatpush.bf16.msra.mxu0 0
    %640 = vmatpush.bf16.msra.mxu0 0
    %641 = vmatpush.bf16.msra.mxu0 0
    %642 = vmatpush.bf16.msra.mxu0 %v630
    %643 = vmatpush.bf16.msra.mxu0 %v629
    %644 = vmatmul.bf16.gmra.mxu0 %v634
    %v645 = vpop.f32.mrf.mxu0
    %v646 = vadd.f32 0.0, %v645
    %v647 = vpop.f32.mrf.mxu0
    %648 = vdwg.mxu0
    %v649 = vadd.f32 %v615, %v646
    %v650 = vxor.u32 %v649, 2147483648
    %v651 = vmul.f32 %v650, 1.442695
    %v652 = vpow.pop %v651
    %v653 = vadd.f32 %v652, 1.0
    %v654 = vrcp.pop %v653
    %v655 = vmul.f32 %v653, %v654
    %v656 = vsub.f32 1.0, %v655
    %v657 = vmul.f32 %v654, %v656
    %v658 = vadd.f32 %v654, %v657
    %vm659 = vweird.f32 %v653
    %vm660 = vweird.f32 %v654
    %vm661 = vmor %vm659, %vm660
    %v662 = vsel %vm661, %v654, %v658
    %v663 = vand.u32 2147483647, %v653
    %vm664 = vcmp.eq.f32.partialorder %v663, 8.507059e+37
    %v665 = vand.u32 %v653, 2147483648
    %v666 = vor.u32 1.1754944e-38, %v665
    %v667 = vsel %vm664, %v666, %v662
    %v668 = vmul.f32 1.0, %v667
    %v669 = vmul.f32 %v668, 2.0
    %v670 = vsub.f32 %v669, 1.0
    %v672 = vrot.slane %v604, 6
    %v674 = vmul.f32 %v668, %v672
    %676 = vrot.lane.b32.xlu0 %v670, 64
    %v677 = vpop.permute.xlu0 %676
    %v679 = vmul.f32 %v668, %v677
    %681 = vrot.lane.b32.xlu0 %v679, 32
    %v682 = vpop.permute.xlu0 %681
    %v684 = vadd.f32 %v674, %v682
    %v685 = vtanh.pop %v684
    %687 = vrot.lane.b32.xlu0 %v685, 64
    %v688 = vpop.permute.xlu0 %687
    %v690 = vmul.f32 %v668, %v688
    %v691 = vpack.c.bf16 %v690, %v690
    %v693 = vperm.slane %v72, 0
    %696 = vrot.lane.b32.xlu0 %v691, 32
    %v697 = vpop.permute.xlu0 %696
    %v702 = vunpack.c.l.b16 %v68
    %v703 = vunpack.c.l.b16 %v69
    %v704 = vunpack.c.l.b16 %v70
    %v705 = vunpack.c.l.b16 %v71
    %v706 = vpack.c.b16 %v703, %v702
    %v707 = vpack.c.b16 %v705, %v704
    %v711 = vsel %vm155, %v697, 0
    %713 = vmatpush.bf16.msra.mxu0 0
    %714 = vmatpush.bf16.msra.mxu0 0
    %715 = vmatpush.bf16.msra.mxu0 0
    %716 = vmatpush.bf16.msra.mxu0 0
    %717 = vmatpush.bf16.msra.mxu0 0
    %718 = vmatpush.bf16.msra.mxu0 0
    %719 = vmatpush.bf16.msra.mxu0 %v707
    %720 = vmatpush.bf16.msra.mxu0 %v706
    %721 = vmatmul.bf16.gmra.mxu0 %v711
    %v722 = vpop.f32.mrf.mxu0
    %v723 = vadd.f32 %v693, %v722
    %v724 = vpop.f32.mrf.mxu0
    %725 = vdwg.mxu0
    %v727 = vrot.slane %v723, 1
    %vm729 = vcmask 122880
    %730 = vst.msk [vmem:[%s8] sm:$0x1] %vm729, %v723
    %731 = vst.msk [vmem:[%s8 + $0x8] sm:$0x1] %vm729, %v727
    %732 = vmatpush.bf16.msra.mxu0 0
    %733 = vmatpush.bf16.msra.mxu0 0
    %734 = vmatpush.bf16.msra.mxu0 0
    %735 = vmatpush.bf16.msra.mxu0 0
    %736 = vmatpush.bf16.msra.mxu0 0
    %737 = vmatpush.bf16.msra.mxu0 0
    %738 = vmatpush.bf16.msra.mxu0 %v630
    %739 = vmatpush.bf16.msra.mxu0 %v629
    %740 = vmatmul.bf16.gmra.mxu0 %v711
    %v741 = vpop.f32.mrf.mxu0
    %v742 = vadd.f32 0.0, %v741
    %v743 = vpop.f32.mrf.mxu0
    %744 = vdwg.mxu0
    %vm745 = vcmp.lt.s32.totalorder %v723, 0
    %v746 = vxor.u32 %v723, 2147483647
    %v747 = vsel %vm745, %v746, %v723
    %v748 = vand.u32 %v747, 4294967280
    %v749 = vor.u32 %v748, %v613
    %vm750 = vcmask 123904
    %v751 = vsel %vm750, %v749, 2147483648
    %v752 = vand.u32 %v751, 65535
    %v753 = vshra.s32 %v751, 16
    %v754 = vcvt.s32.f32 %v752
    %v755 = vcvt.s32.f32 %v753
    %756 = vmax.xlane.f32.xlu0 %v755
    %v757 = vpop.xlane.xlu0 %756
    %vm758 = vcmp.eq.f32.partialorder %v755, %v757
    %v759 = vsel %vm758, %v754, -inf
    %760 = vmax.xlane.f32.xlu0 %v759
    %v761 = vpop.xlane.xlu0 %760
    %v762 = vcvt.f32.s32 %v761
    %v763 = vcvt.f32.s32 %v757
    %v764 = vshll.u32 %v763, 16
    %v765 = vadd.s32 %v764, %v762
    %vm766 = vcmp.eq.s32.totalorder %v749, %v765
    %v767 = vsel %vm766, 1, 0
    %v768 = vcvt.s32.f32 %v767
    %v769 = vpack.c.bf16 %v768, %v768
    %v772 = vunpack.c.l.b16 %v62
    %v773 = vunpack.c.l.b16 %v63
    %v774 = vpack.c.b16 %v773, %v772
    %vm776 = vcmask 130048
    %v778 = vsel %vm776, %v769, 0
    %780 = vmatpush.bf16.msra.mxu0 0
    %781 = vmatpush.bf16.msra.mxu0 0
    %782 = vmatpush.bf16.msra.mxu0 0
    %783 = vmatpush.bf16.msra.mxu0 0
    %784 = vmatpush.bf16.msra.mxu0 0
    %785 = vmatpush.bf16.msra.mxu0 0
    %786 = vmatpush.bf16.msra.mxu0 0
    %787 = vmatpush.bf16.msra.mxu0 %v774
    %788 = vmatmul.bf16.gmra.mxu0 %v778
    %v789 = vpop.f32.mrf.mxu0
    %v790 = vadd.f32 %v742, %v789
    %v791 = vpop.f32.mrf.mxu0
    %792 = vdwg.mxu0
    %v793 = vxor.u32 %v790, 2147483648
    %v794 = vmul.f32 %v793, 1.442695
    %v795 = vpow.pop %v794
    %v796 = vadd.f32 %v795, 1.0
    %v797 = vrcp.pop %v796
    %v798 = vmul.f32 %v796, %v797
    %v799 = vsub.f32 1.0, %v798
    %v800 = vmul.f32 %v797, %v799
    %v801 = vadd.f32 %v797, %v800
    %vm802 = vweird.f32 %v796
    %vm803 = vweird.f32 %v797
    %vm804 = vmor %vm802, %vm803
    %v805 = vsel %vm804, %v797, %v801
    %v806 = vand.u32 2147483647, %v796
    %vm807 = vcmp.eq.f32.partialorder %v806, 8.507059e+37
    %v808 = vand.u32 %v796, 2147483648
    %v809 = vor.u32 1.1754944e-38, %v808
    %v810 = vsel %vm807, %v809, %v805
    %v811 = vmul.f32 1.0, %v810
    %v812 = vmul.f32 %v811, 2.0
    %v813 = vsub.f32 %v812, 1.0
    %v814 = vmul.f32 %v811, %v684
    %816 = vrot.lane.b32.xlu0 %v813, 64
    %v817 = vpop.permute.xlu0 %816
    %v819 = vmul.f32 %v811, %v817
    %821 = vrot.lane.b32.xlu0 %v819, 32
    %v822 = vpop.permute.xlu0 %821
    %v824 = vadd.f32 %v814, %v822
    %v825 = vtanh.pop %v824
    %827 = vrot.lane.b32.xlu0 %v825, 64
    %v828 = vpop.permute.xlu0 %827
    %v830 = vmul.f32 %v811, %v828
    %v831 = vpack.c.bf16 %v830, %v830
    %833 = vrot.lane.b32.xlu0 %v831, 32
    %v834 = vpop.permute.xlu0 %833
    %v836 = vsel %vm155, %v834, 0
    %838 = vmatpush.bf16.msra.mxu0 0
    %839 = vmatpush.bf16.msra.mxu0 0
    %840 = vmatpush.bf16.msra.mxu0 0
    %841 = vmatpush.bf16.msra.mxu0 0
    %842 = vmatpush.bf16.msra.mxu0 0
    %843 = vmatpush.bf16.msra.mxu0 0
    %844 = vmatpush.bf16.msra.mxu0 %v707
    %845 = vmatpush.bf16.msra.mxu0 %v706
    %846 = vmatmul.bf16.gmra.mxu0 %v836
    %v847 = vpop.f32.mrf.mxu0
    %v848 = vadd.f32 %v693, %v847
    %v849 = vpop.f32.mrf.mxu0
    %850 = vdwg.mxu0
    %v852 = vrot.slane %v848, 1
    %854 = vst.msk [vmem:[%s8 + $0x1] sm:$0x1] %vm729, %v848
    %855 = vst.msk [vmem:[%s8 + $0x9] sm:$0x1] %vm729, %v852
    %856 = vmatpush.bf16.msra.mxu0 0
    %857 = vmatpush.bf16.msra.mxu0 0
    %858 = vmatpush.bf16.msra.mxu0 0
    %859 = vmatpush.bf16.msra.mxu0 0
    %860 = vmatpush.bf16.msra.mxu0 0
    %861 = vmatpush.bf16.msra.mxu0 0
    %862 = vmatpush.bf16.msra.mxu0 %v630
    %863 = vmatpush.bf16.msra.mxu0 %v629
    %864 = vmatmul.bf16.gmra.mxu0 %v836
    %v865 = vpop.f32.mrf.mxu0
    %v866 = vadd.f32 0.0, %v865
    %v867 = vpop.f32.mrf.mxu0
    %868 = vdwg.mxu0
    %vm869 = vcmp.lt.s32.totalorder %v848, 0
    %v870 = vxor.u32 %v848, 2147483647
    %v871 = vsel %vm869, %v870, %v848
    %v872 = vand.u32 %v871, 4294967280
    %v873 = vor.u32 %v872, %v613
    %v874 = vsel %vm750, %v873, 2147483648
    %v875 = vand.u32 %v874, 65535
    %v876 = vshra.s32 %v874, 16
    %v877 = vcvt.s32.f32 %v875
    %v878 = vcvt.s32.f32 %v876
    %879 = vmax.xlane.f32.xlu0 %v878
    %v880 = vpop.xlane.xlu0 %879
    %vm881 = vcmp.eq.f32.partialorder %v878, %v880
    %v882 = vsel %vm881, %v877, -inf
    %883 = vmax.xlane.f32.xlu0 %v882
    %v884 = vpop.xlane.xlu0 %883
    %v885 = vcvt.f32.s32 %v884
    %v886 = vcvt.f32.s32 %v880
    %v887 = vshll.u32 %v886, 16
    %v888 = vadd.s32 %v887, %v885
    %vm889 = vcmp.eq.s32.totalorder %v873, %v888
    %v890 = vsel %vm889, 1, 0
    %v891 = vcvt.s32.f32 %v890
    %v892 = vpack.c.bf16 %v891, %v891
    %v894 = vsel %vm776, %v892, 0
    %896 = vmatpush.bf16.msra.mxu0 0
    %897 = vmatpush.bf16.msra.mxu0 0
    %898 = vmatpush.bf16.msra.mxu0 0
    %899 = vmatpush.bf16.msra.mxu0 0
    %900 = vmatpush.bf16.msra.mxu0 0
    %901 = vmatpush.bf16.msra.mxu0 0
    %902 = vmatpush.bf16.msra.mxu0 0
    %903 = vmatpush.bf16.msra.mxu0 %v774
    %904 = vmatmul.bf16.gmra.mxu0 %v894
    %v905 = vpop.f32.mrf.mxu0
    %v906 = vadd.f32 %v866, %v905
    %v907 = vpop.f32.mrf.mxu0
    %908 = vdwg.mxu0
    %v909 = vxor.u32 %v906, 2147483648
    %v910 = vmul.f32 %v909, 1.442695
    %v911 = vpow.pop %v910
    %v912 = vadd.f32 %v911, 1.0
    %v913 = vrcp.pop %v912
    %v914 = vmul.f32 %v912, %v913
    %v915 = vsub.f32 1.0, %v914
    %v916 = vmul.f32 %v913, %v915
    %v917 = vadd.f32 %v913, %v916
    %vm918 = vweird.f32 %v912
    %vm919 = vweird.f32 %v913
    %vm920 = vmor %vm918, %vm919
    %v921 = vsel %vm920, %v913, %v917
    %v922 = vand.u32 2147483647, %v912
    %vm923 = vcmp.eq.f32.partialorder %v922, 8.507059e+37
    %v924 = vand.u32 %v912, 2147483648
    %v925 = vor.u32 1.1754944e-38, %v924
    %v926 = vsel %vm923, %v925, %v921
    %v927 = vmul.f32 1.0, %v926
    %v928 = vmul.f32 %v927, 2.0
    %v929 = vsub.f32 %v928, 1.0
    %v930 = vmul.f32 %v927, %v824
    %932 = vrot.lane.b32.xlu0 %v929, 64
    %v933 = vpop.permute.xlu0 %932
    %v935 = vmul.f32 %v927, %v933
    %937 = vrot.lane.b32.xlu0 %v935, 32
    %v938 = vpop.permute.xlu0 %937
    %v940 = vadd.f32 %v930, %v938
    %v941 = vtanh.pop %v940
    %943 = vrot.lane.b32.xlu0 %v941, 64
    %v944 = vpop.permute.xlu0 %943
    %v946 = vmul.f32 %v927, %v944
    %v947 = vpack.c.bf16 %v946, %v946
    %949 = vrot.lane.b32.xlu0 %v947, 32
    %v950 = vpop.permute.xlu0 %949
    %v952 = vsel %vm155, %v950, 0
    %954 = vmatpush.bf16.msra.mxu0 0
    %955 = vmatpush.bf16.msra.mxu0 0
    %956 = vmatpush.bf16.msra.mxu0 0
    %957 = vmatpush.bf16.msra.mxu0 0
    %958 = vmatpush.bf16.msra.mxu0 0
    %959 = vmatpush.bf16.msra.mxu0 0
    %960 = vmatpush.bf16.msra.mxu0 %v707
    %961 = vmatpush.bf16.msra.mxu0 %v706
    %962 = vmatmul.bf16.gmra.mxu0 %v952
    %v963 = vpop.f32.mrf.mxu0
    %v964 = vadd.f32 %v693, %v963
    %v965 = vpop.f32.mrf.mxu0
    %966 = vdwg.mxu0
    %v968 = vrot.slane %v964, 1
    %970 = vst.msk [vmem:[%s8 + $0x2] sm:$0x1] %vm729, %v964
    %971 = vst.msk [vmem:[%s8 + $0xa] sm:$0x1] %vm729, %v968
    %972 = vmatpush.bf16.msra.mxu0 0
    %973 = vmatpush.bf16.msra.mxu0 0
    %974 = vmatpush.bf16.msra.mxu0 0
    %975 = vmatpush.bf16.msra.mxu0 0
    %976 = vmatpush.bf16.msra.mxu0 0
    %977 = vmatpush.bf16.msra.mxu0 0
    %978 = vmatpush.bf16.msra.mxu0 %v630
    %979 = vmatpush.bf16.msra.mxu0 %v629
    %980 = vmatmul.bf16.gmra.mxu0 %v952
    %v981 = vpop.f32.mrf.mxu0
    %v982 = vadd.f32 0.0, %v981
    %v983 = vpop.f32.mrf.mxu0
    %984 = vdwg.mxu0
    %vm985 = vcmp.lt.s32.totalorder %v964, 0
    %v986 = vxor.u32 %v964, 2147483647
    %v987 = vsel %vm985, %v986, %v964
    %v988 = vand.u32 %v987, 4294967280
    %v989 = vor.u32 %v988, %v613
    %v990 = vsel %vm750, %v989, 2147483648
    %v991 = vand.u32 %v990, 65535
    %v992 = vshra.s32 %v990, 16
    %v993 = vcvt.s32.f32 %v991
    %v994 = vcvt.s32.f32 %v992
    %995 = vmax.xlane.f32.xlu0 %v994
    %v996 = vpop.xlane.xlu0 %995
    %vm997 = vcmp.eq.f32.partialorder %v994, %v996
    %v998 = vsel %vm997, %v993, -inf
    %999 = vmax.xlane.f32.xlu0 %v998
    %v1000 = vpop.xlane.xlu0 %999
    %v1001 = vcvt.f32.s32 %v1000
    %v1002 = vcvt.f32.s32 %v996
    %v1003 = vshll.u32 %v1002, 16
    %v1004 = vadd.s32 %v1003, %v1001
    %vm1005 = vcmp.eq.s32.totalorder %v989, %v1004
    %v1006 = vsel %vm1005, 1, 0
    %v1007 = vcvt.s32.f32 %v1006
    %v1008 = vpack.c.bf16 %v1007, %v1007
    %v1010 = vsel %vm776, %v1008, 0
    %1012 = vmatpush.bf16.msra.mxu0 0
    %1013 = vmatpush.bf16.msra.mxu0 0
    %1014 = vmatpush.bf16.msra.mxu0 0
    %1015 = vmatpush.bf16.msra.mxu0 0
    %1016 = vmatpush.bf16.msra.mxu0 0
    %1017 = vmatpush.bf16.msra.mxu0 0
    %1018 = vmatpush.bf16.msra.mxu0 0
    %1019 = vmatpush.bf16.msra.mxu0 %v774
    %1020 = vmatmul.bf16.gmra.mxu0 %v1010
    %v1021 = vpop.f32.mrf.mxu0
    %v1022 = vadd.f32 %v982, %v1021
    %v1023 = vpop.f32.mrf.mxu0
    %1024 = vdwg.mxu0
    %v1025 = vxor.u32 %v1022, 2147483648
    %v1026 = vmul.f32 %v1025, 1.442695
    %v1027 = vpow.pop %v1026
    %v1028 = vadd.f32 %v1027, 1.0
    %v1029 = vrcp.pop %v1028
    %v1030 = vmul.f32 %v1028, %v1029
    %v1031 = vsub.f32 1.0, %v1030
    %v1032 = vmul.f32 %v1029, %v1031
    %v1033 = vadd.f32 %v1029, %v1032
    %vm1034 = vweird.f32 %v1028
    %vm1035 = vweird.f32 %v1029
    %vm1036 = vmor %vm1034, %vm1035
    %v1037 = vsel %vm1036, %v1029, %v1033
    %v1038 = vand.u32 2147483647, %v1028
    %vm1039 = vcmp.eq.f32.partialorder %v1038, 8.507059e+37
    %v1040 = vand.u32 %v1028, 2147483648
    %v1041 = vor.u32 1.1754944e-38, %v1040
    %v1042 = vsel %vm1039, %v1041, %v1037
    %v1043 = vmul.f32 1.0, %v1042
    %v1044 = vmul.f32 %v1043, 2.0
    %v1045 = vsub.f32 %v1044, 1.0
    %v1046 = vmul.f32 %v1043, %v940
    %1048 = vrot.lane.b32.xlu0 %v1045, 64
    %v1049 = vpop.permute.xlu0 %1048
    %v1051 = vmul.f32 %v1043, %v1049
    %1053 = vrot.lane.b32.xlu0 %v1051, 32
    %v1054 = vpop.permute.xlu0 %1053
    %v1056 = vadd.f32 %v1046, %v1054
    %v1057 = vtanh.pop %v1056
    %1059 = vrot.lane.b32.xlu0 %v1057, 64
    %v1060 = vpop.permute.xlu0 %1059
    %v1062 = vmul.f32 %v1043, %v1060
    %v1063 = vpack.c.bf16 %v1062, %v1062
    %1065 = vrot.lane.b32.xlu0 %v1063, 32
    %v1066 = vpop.permute.xlu0 %1065
    %v1068 = vsel %vm155, %v1066, 0
    %1070 = vmatpush.bf16.msra.mxu0 0
    %1071 = vmatpush.bf16.msra.mxu0 0
    %1072 = vmatpush.bf16.msra.mxu0 0
    %1073 = vmatpush.bf16.msra.mxu0 0
    %1074 = vmatpush.bf16.msra.mxu0 0
    %1075 = vmatpush.bf16.msra.mxu0 0
    %1076 = vmatpush.bf16.msra.mxu0 %v707
    %1077 = vmatpush.bf16.msra.mxu0 %v706
    %1078 = vmatmul.bf16.gmra.mxu0 %v1068
    %v1079 = vpop.f32.mrf.mxu0
    %v1080 = vadd.f32 %v693, %v1079
    %v1081 = vpop.f32.mrf.mxu0
    %1082 = vdwg.mxu0
    %v1084 = vrot.slane %v1080, 1
    %1086 = vst.msk [vmem:[%s8 + $0x3] sm:$0x1] %vm729, %v1080
    %1087 = vst.msk [vmem:[%s8 + $0xb] sm:$0x1] %vm729, %v1084
    %1088 = vmatpush.bf16.msra.mxu0 0
    %1089 = vmatpush.bf16.msra.mxu0 0
    %1090 = vmatpush.bf16.msra.mxu0 0
    %1091 = vmatpush.bf16.msra.mxu0 0
    %1092 = vmatpush.bf16.msra.mxu0 0
    %1093 = vmatpush.bf16.msra.mxu0 0
    %1094 = vmatpush.bf16.msra.mxu0 %v630
    %1095 = vmatpush.bf16.msra.mxu0 %v629
    %1096 = vmatmul.bf16.gmra.mxu0 %v1068
    %v1097 = vpop.f32.mrf.mxu0
    %v1098 = vadd.f32 0.0, %v1097
    %v1099 = vpop.f32.mrf.mxu0
    %1100 = vdwg.mxu0
    %vm1101 = vcmp.lt.s32.totalorder %v1080, 0
    %v1102 = vxor.u32 %v1080, 2147483647
    %v1103 = vsel %vm1101, %v1102, %v1080
    %v1104 = vand.u32 %v1103, 4294967280
    %v1105 = vor.u32 %v1104, %v613
    %v1106 = vsel %vm750, %v1105, 2147483648
    %v1107 = vand.u32 %v1106, 65535
    %v1108 = vshra.s32 %v1106, 16
    %v1109 = vcvt.s32.f32 %v1107
    %v1110 = vcvt.s32.f32 %v1108
    %1111 = vmax.xlane.f32.xlu0 %v1110
    %v1112 = vpop.xlane.xlu0 %1111
    %vm1113 = vcmp.eq.f32.partialorder %v1110, %v1112
    %v1114 = vsel %vm1113, %v1109, -inf
    %1115 = vmax.xlane.f32.xlu0 %v1114
    %v1116 = vpop.xlane.xlu0 %1115
    %v1117 = vcvt.f32.s32 %v1116
    %v1118 = vcvt.f32.s32 %v1112
    %v1119 = vshll.u32 %v1118, 16
    %v1120 = vadd.s32 %v1119, %v1117
    %vm1121 = vcmp.eq.s32.totalorder %v1105, %v1120
    %v1122 = vsel %vm1121, 1, 0
    %v1123 = vcvt.s32.f32 %v1122
    %v1124 = vpack.c.bf16 %v1123, %v1123
    %v1126 = vsel %vm776, %v1124, 0
    %1128 = vmatpush.bf16.msra.mxu0 0
    %1129 = vmatpush.bf16.msra.mxu0 0
    %1130 = vmatpush.bf16.msra.mxu0 0
    %1131 = vmatpush.bf16.msra.mxu0 0
    %1132 = vmatpush.bf16.msra.mxu0 0
    %1133 = vmatpush.bf16.msra.mxu0 0
    %1134 = vmatpush.bf16.msra.mxu0 0
    %1135 = vmatpush.bf16.msra.mxu0 %v774
    %1136 = vmatmul.bf16.gmra.mxu0 %v1126
    %v1137 = vpop.f32.mrf.mxu0
    %v1138 = vadd.f32 %v1098, %v1137
    %v1139 = vpop.f32.mrf.mxu0
    %1140 = vdwg.mxu0
    %v1141 = vxor.u32 %v1138, 2147483648
    %v1142 = vmul.f32 %v1141, 1.442695
    %v1143 = vpow.pop %v1142
    %v1144 = vadd.f32 %v1143, 1.0
    %v1145 = vrcp.pop %v1144
    %v1146 = vmul.f32 %v1144, %v1145
    %v1147 = vsub.f32 1.0, %v1146
    %v1148 = vmul.f32 %v1145, %v1147
    %v1149 = vadd.f32 %v1145, %v1148
    %vm1150 = vweird.f32 %v1144
    %vm1151 = vweird.f32 %v1145
    %vm1152 = vmor %vm1150, %vm1151
    %v1153 = vsel %vm1152, %v1145, %v1149
    %v1154 = vand.u32 2147483647, %v1144
    %vm1155 = vcmp.eq.f32.partialorder %v1154, 8.507059e+37
    %v1156 = vand.u32 %v1144, 2147483648
    %v1157 = vor.u32 1.1754944e-38, %v1156
    %v1158 = vsel %vm1155, %v1157, %v1153
    %v1159 = vmul.f32 1.0, %v1158
    %v1160 = vmul.f32 %v1159, 2.0
    %v1161 = vsub.f32 %v1160, 1.0
    %v1162 = vmul.f32 %v1159, %v1056
    %1164 = vrot.lane.b32.xlu0 %v1161, 64
    %v1165 = vpop.permute.xlu0 %1164
    %v1167 = vmul.f32 %v1159, %v1165
    %1169 = vrot.lane.b32.xlu0 %v1167, 32
    %v1170 = vpop.permute.xlu0 %1169
    %v1172 = vadd.f32 %v1162, %v1170
    %v1173 = vtanh.pop %v1172
    %1175 = vrot.lane.b32.xlu0 %v1173, 64
    %v1176 = vpop.permute.xlu0 %1175
    %v1178 = vmul.f32 %v1159, %v1176
    %v1179 = vpack.c.bf16 %v1178, %v1178
    %1181 = vrot.lane.b32.xlu0 %v1179, 32
    %v1182 = vpop.permute.xlu0 %1181
    %v1184 = vsel %vm155, %v1182, 0
    %1186 = vmatpush.bf16.msra.mxu0 0
    %1187 = vmatpush.bf16.msra.mxu0 0
    %1188 = vmatpush.bf16.msra.mxu0 0
    %1189 = vmatpush.bf16.msra.mxu0 0
    %1190 = vmatpush.bf16.msra.mxu0 0
    %1191 = vmatpush.bf16.msra.mxu0 0
    %1192 = vmatpush.bf16.msra.mxu0 %v707
    %1193 = vmatpush.bf16.msra.mxu0 %v706
    %1194 = vmatmul.bf16.gmra.mxu0 %v1184
    %v1195 = vpop.f32.mrf.mxu0
    %v1196 = vadd.f32 %v693, %v1195
    %v1197 = vpop.f32.mrf.mxu0
    %1198 = vdwg.mxu0
    %v1200 = vrot.slane %v1196, 1
    %1202 = vst.msk [vmem:[%s8 + $0x4] sm:$0x1] %vm729, %v1196
    %1203 = vst.msk [vmem:[%s8 + $0xc] sm:$0x1] %vm729, %v1200
    %1204 = vmatpush.bf16.msra.mxu0 0
    %1205 = vmatpush.bf16.msra.mxu0 0
    %1206 = vmatpush.bf16.msra.mxu0 0
    %1207 = vmatpush.bf16.msra.mxu0 0
    %1208 = vmatpush.bf16.msra.mxu0 0
    %1209 = vmatpush.bf16.msra.mxu0 0
    %1210 = vmatpush.bf16.msra.mxu0 %v630
    %1211 = vmatpush.bf16.msra.mxu0 %v629
    %1212 = vmatmul.bf16.gmra.mxu0 %v1184
    %v1213 = vpop.f32.mrf.mxu0
    %v1214 = vadd.f32 0.0, %v1213
    %v1215 = vpop.f32.mrf.mxu0
    %1216 = vdwg.mxu0
    %vm1217 = vcmp.lt.s32.totalorder %v1196, 0
    %v1218 = vxor.u32 %v1196, 2147483647
    %v1219 = vsel %vm1217, %v1218, %v1196
    %v1220 = vand.u32 %v1219, 4294967280
    %v1221 = vor.u32 %v1220, %v613
    %v1222 = vsel %vm750, %v1221, 2147483648
    %v1223 = vand.u32 %v1222, 65535
    %v1224 = vshra.s32 %v1222, 16
    %v1225 = vcvt.s32.f32 %v1223
    %v1226 = vcvt.s32.f32 %v1224
    %1227 = vmax.xlane.f32.xlu0 %v1226
    %v1228 = vpop.xlane.xlu0 %1227
    %vm1229 = vcmp.eq.f32.partialorder %v1226, %v1228
    %v1230 = vsel %vm1229, %v1225, -inf
    %1231 = vmax.xlane.f32.xlu0 %v1230
    %v1232 = vpop.xlane.xlu0 %1231
    %v1233 = vcvt.f32.s32 %v1232
    %v1234 = vcvt.f32.s32 %v1228
    %v1235 = vshll.u32 %v1234, 16
    %v1236 = vadd.s32 %v1235, %v1233
    %vm1237 = vcmp.eq.s32.totalorder %v1221, %v1236
    %v1238 = vsel %vm1237, 1, 0
    %v1239 = vcvt.s32.f32 %v1238
    %v1240 = vpack.c.bf16 %v1239, %v1239
    %v1242 = vsel %vm776, %v1240, 0
    %1244 = vmatpush.bf16.msra.mxu0 0
    %1245 = vmatpush.bf16.msra.mxu0 0
    %1246 = vmatpush.bf16.msra.mxu0 0
    %1247 = vmatpush.bf16.msra.mxu0 0
    %1248 = vmatpush.bf16.msra.mxu0 0
    %1249 = vmatpush.bf16.msra.mxu0 0
    %1250 = vmatpush.bf16.msra.mxu0 0
    %1251 = vmatpush.bf16.msra.mxu0 %v774
    %1252 = vmatmul.bf16.gmra.mxu0 %v1242
    %v1253 = vpop.f32.mrf.mxu0
    %v1254 = vadd.f32 %v1214, %v1253
    %v1255 = vpop.f32.mrf.mxu0
    %1256 = vdwg.mxu0
    %v1257 = vxor.u32 %v1254, 2147483648
    %v1258 = vmul.f32 %v1257, 1.442695
    %v1259 = vpow.pop %v1258
    %v1260 = vadd.f32 %v1259, 1.0
    %v1261 = vrcp.pop %v1260
    %v1262 = vmul.f32 %v1260, %v1261
    %v1263 = vsub.f32 1.0, %v1262
    %v1264 = vmul.f32 %v1261, %v1263
    %v1265 = vadd.f32 %v1261, %v1264
    %vm1266 = vweird.f32 %v1260
    %vm1267 = vweird.f32 %v1261
    %vm1268 = vmor %vm1266, %vm1267
    %v1269 = vsel %vm1268, %v1261, %v1265
    %v1270 = vand.u32 2147483647, %v1260
    %vm1271 = vcmp.eq.f32.partialorder %v1270, 8.507059e+37
    %v1272 = vand.u32 %v1260, 2147483648
    %v1273 = vor.u32 1.1754944e-38, %v1272
    %v1274 = vsel %vm1271, %v1273, %v1269
    %v1275 = vmul.f32 1.0, %v1274
    %v1276 = vmul.f32 %v1275, 2.0
    %v1277 = vsub.f32 %v1276, 1.0
    %v1278 = vmul.f32 %v1275, %v1172
    %1280 = vrot.lane.b32.xlu0 %v1277, 64
    %v1281 = vpop.permute.xlu0 %1280
    %v1283 = vmul.f32 %v1275, %v1281
    %1285 = vrot.lane.b32.xlu0 %v1283, 32
    %v1286 = vpop.permute.xlu0 %1285
    %v1288 = vadd.f32 %v1278, %v1286
    %v1289 = vtanh.pop %v1288
    %1291 = vrot.lane.b32.xlu0 %v1289, 64
    %v1292 = vpop.permute.xlu0 %1291
    %v1294 = vmul.f32 %v1275, %v1292
    %v1295 = vpack.c.bf16 %v1294, %v1294
    %1297 = vrot.lane.b32.xlu0 %v1295, 32
    %v1298 = vpop.permute.xlu0 %1297
    %v1300 = vsel %vm155, %v1298, 0
    %1302 = vmatpush.bf16.msra.mxu0 0
    %1303 = vmatpush.bf16.msra.mxu0 0
    %1304 = vmatpush.bf16.msra.mxu0 0
    %1305 = vmatpush.bf16.msra.mxu0 0
    %1306 = vmatpush.bf16.msra.mxu0 0
    %1307 = vmatpush.bf16.msra.mxu0 0
    %1308 = vmatpush.bf16.msra.mxu0 %v707
    %1309 = vmatpush.bf16.msra.mxu0 %v706
    %1310 = vmatmul.bf16.gmra.mxu0 %v1300
    %v1311 = vpop.f32.mrf.mxu0
    %v1312 = vadd.f32 %v693, %v1311
    %v1313 = vpop.f32.mrf.mxu0
    %1314 = vdwg.mxu0
    %v1316 = vrot.slane %v1312, 1
    %1318 = vst.msk [vmem:[%s8 + $0x5] sm:$0x1] %vm729, %v1312
    %1319 = vst.msk [vmem:[%s8 + $0xd] sm:$0x1] %vm729, %v1316
    // Predicated region
    $region42: #{autoregressive_lstm.1} parent=1 // pred_check
      _
    $region43: #{autoregressive_lstm.1} parent=1 // pred_check_branch
      %1321 = sbr.rel (0) target = $region45
    $region44: #{autoregressive_lstm.1} parent=1 // pred_region
      _
    $region45: #{autoregressive_lstm.1} parent=1 // pred_fallthru
      _
    // Predicated region
    $region46: #{autoregressive_lstm.1} parent=1 // pred_check
      _
    $region47: #{autoregressive_lstm.1} parent=1 // pred_check_branch
      %1323 = sbr.rel (0) target = $region49
    $region48: #{autoregressive_lstm.1} parent=1 // pred_region
      _
    $region49: #{autoregressive_lstm.1} parent=1 // pred_fallthru
      _
    %1324 = vsyncpa [#allocation3], 1
    %1325 = vsyncpa [#allocation5], 1

</llo_original>
